<compile_context>
chip_gen: v7x
topology: tpu7x:2x2x1
jax: 0.10.0
libtpu: 0.0.40
codegen_flags: <defaults>
</compile_context>

<pallas_src>
import jax
import jax.numpy as jnp
from jax.experimental import pallas as pl
from jax.experimental.pallas import tpu as pltpu


def _round_up(x, m):
    return (x + m - 1) // m * m


def _physical_vmem_bytes():
    # Generation-aware VMEM: 128 MiB per TensorCore on v5e/v6e, 64 MiB on v7x.
    try:
        return int(pltpu.get_tpu_info().vmem_capacity_bytes)
    except Exception:
        return 64 * 1024 * 1024  # conservative fallback (v7x per-TC VMEM)


def _node_apply_kernel(h_ref, w_ref, b_ref, o_ref):
    # Hot path: MXU matmul with f32 accumulation; bias add + ReLU stay f32 on
    # the VPU; a single dtype cast at the final store.
    acc = jnp.dot(h_ref[...], w_ref[...], preferred_element_type=jnp.float32)
    acc = acc + b_ref[...]                      # bias broadcast over rows (f32)
    o_ref[...] = jnp.maximum(acc, 0.0).astype(o_ref.dtype)


def node_apply(h, weight, bias, *, tile_n=256, tile_out=512,
               compute_dtype=jnp.bfloat16, out_dtype=None):
    """ReLU(h @ weight + bias) as a tiled Pallas TPU kernel.

    h:      (N, in_feats)
    weight: (in_feats, out_feats)   # == nn.Linear.weight.T
    bias:   (out_feats,)
    compute_dtype: MXU-input dtype. The layer is HBM-bound on every TPU
        generation, so bf16 inputs (half the h/W traffic) are the default;
        accumulation and the bias/ReLU epilogue are always float32.  In
        production pass h/weight already in this dtype so the cast is free.
        Use compute_dtype=jnp.float32 (or None) for exact f32 semantics.
    out_dtype: output dtype (defaults to h.dtype).
    """
    N, in_feats = h.shape
    out_feats = weight.shape[1]
    if out_dtype is None:
        out_dtype = h.dtype

    # ---- dtype handling ------------------------------------------------------
    if compute_dtype is not None and h.dtype != compute_dtype:
        h = h.astype(compute_dtype)
    if compute_dtype is not None and weight.dtype != compute_dtype:
        weight = weight.astype(compute_dtype)
    bias2d = bias.astype(jnp.float32).reshape(1, out_feats)   # bias stays f32

    in_bpe = jnp.dtype(h.dtype).itemsize
    out_bpe = jnp.dtype(out_dtype).itemsize
    # Sublane packing: f32 -> 8 rows / vreg, bf16 -> 16, int8/fp8 -> 32.
    row_mult = 8 * max(1, 4 // in_bpe)

    # ---- VMEM budget (leave ~20% headroom for compiler scratch / semaphores) -
    vmem_cap = int(0.8 * _physical_vmem_bytes())

    def _tiles_vmem(tn, to):
        # Worst case (everything double-buffered; weight/bias are actually
        # single-buffered on the fast path).
        return (2 * tn * in_feats * in_bpe      # h tile
                + 2 * in_feats * to * in_bpe    # weight tile
                + 2 * to * 4                    # bias tile (f32)
                + 2 * tn * to * out_bpe)        # out tile

    # ---- tile sizing ---------------------------------------------------------
    total_bytes = (N * in_feats * in_bpe + in_feats * out_feats * in_bpe
                   + out_feats * 4 + N * out_feats * out_bpe)
    if total_bytes <= (2 << 20):
        # Small problem: one grid step (per-step overhead ~0.35us dominates the
        # tiny HBM traffic); full-array blocks are always legal block shapes.
        tile_n, tile_out = N, out_feats
    else:
        # Row tile: multiple of the sublane packing, or the full row dim.
        tile_n = _round_up(min(tile_n, N), row_mult)
        if tile_n >= N:
            tile_n = N
        # Column tile: multiple of 128 (lane-dense, unmasked stores), or the
        # full output dim when it is smaller than the requested tile.
        if tile_out >= out_feats:
            tile_out = out_feats
        else:
            tile_out = _round_up(tile_out, 128)

        # Shrink tiles (columns first, then rows) until the blocks fit the VMEM
        # budget.  NOTE: for very large in_feats the right fix is a K grid axis
        # ("arbitrary") with an f32 VMEM accumulator + pl.when init/finalize,
        # bounding per-buffer VMEM by tile_k instead of in_feats.
        while _tiles_vmem(tile_n, tile_out) > vmem_cap:
            if tile_out > 128:
                tile_out = max(128, _round_up(tile_out // 2, 128))
            elif tile_n > row_mult:
                tile_n = max(row_mult, _round_up(tile_n // 2, row_mult))
            else:
                break

    grid = (pl.cdiv(out_feats, tile_out), pl.cdiv(N, tile_n))
    vmem_limit = int(min(vmem_cap,
                         max(_tiles_vmem(tile_n, tile_out) + (2 << 20),
                             16 << 20)))

    def _build(single_buffer_params):
        # Weight/bias blocks are invariant across the inner row sweep, so they
        # gain nothing from double buffering; Buffered(1) saves a full
        # (in_feats, tile_out) weight copy of VMEM.
        pm = {"pipeline_mode": pl.Buffered(1)} if single_buffer_params else {}
        grid_spec = pltpu.PrefetchScalarGridSpec(
            num_scalar_prefetch=0,
            grid=grid,                                  # (col tiles, row tiles)
            in_specs=[
                pl.BlockSpec((tile_n, in_feats), lambda j, i: (i, 0)),
                pl.BlockSpec((in_feats, tile_out), lambda j, i: (0, j), **pm),
                pl.BlockSpec((1, tile_out), lambda j, i: (0, j), **pm),
            ],
            out_specs=pl.BlockSpec((tile_n, tile_out), lambda j, i: (i, j)),
        )
        return pl.pallas_call(
            _node_apply_kernel,
            out_shape=jax.ShapeDtypeStruct((N, out_feats), out_dtype),
            grid_spec=grid_spec,
            compiler_params=pltpu.CompilerParams(
                # Both axes are independent; rows (the large axis) are innermost
                # so W/bias are DMA'd once per column tile.  On v7x Mosaic can
                # shard the 'parallel' axes across its 2 TensorCores; if the
                # leading (column) axis has size 1 and sharding only applies to
                # it, split the row axis instead.
                dimension_semantics=("parallel", "parallel"),
                vmem_limit_bytes=vmem_limit,
            ),
        )

    try:
        return _build(True)(h, weight, bias2d)
    except Exception:
        # Fallback for jax versions that reject single-buffered BlockSpecs;
        # identical numerics, default double buffering.
        return _build(False)(h, weight, bias2d)


if __name__ == "__main__":
    key = jax.random.PRNGKey(0)
    k_h, k_w, k_b, k_h2, k_w2, k_b2 = jax.random.split(key, 6)

    # --- NodeApplyModule(in_feats=32, out_feats=48, activation=ReLU) ----------
    # Ragged N and out_feats < 128: exercises full-dim blocks, masked stores on
    # the narrow output, and the single-grid-step small-problem path.
    N, in_feats, out_feats = 1000, 32, 48
    bound = 1.0 / (in_feats ** 0.5)
    weight = jax.random.uniform(k_w, (in_feats, out_feats),
                                minval=-bound, maxval=bound, dtype=jnp.float32)
    bias = jax.random.uniform(k_b, (out_feats,),
                              minval=-bound, maxval=bound, dtype=jnp.float32)
    h = jax.random.normal(k_h, (N, in_feats), dtype=jnp.float32)
    ref = jnp.maximum(h @ weight + bias, 0.0)

    # f32 MXU-input path: matches the PyTorch module's f32 semantics.
    out_f32 = jax.block_until_ready(
        node_apply(h, weight, bias, compute_dtype=jnp.float32))
    assert out_f32.shape == (N, out_feats)
    assert jnp.allclose(out_f32, ref, atol=1e-5, rtol=1e-5)

    # Default bf16 MXU-input path (HBM-bound layer => ~2x less input traffic);
    # accumulation/bias/ReLU stay f32, so only input rounding error remains.
    out_bf16 = jax.block_until_ready(node_apply(h, weight, bias))
    assert out_bf16.shape == (N, out_feats)
    assert jnp.allclose(out_bf16, ref, atol=5e-2, rtol=5e-2)

    # --- larger ragged shape: exercises the multi-tile grid (row axis
    #     innermost, resident single-buffered weights) and a ragged last block.
    N2, in2, out2 = 3000, 128, 256
    bound2 = 1.0 / (in2 ** 0.5)
    w2 = jax.random.uniform(k_w2, (in2, out2),
                            minval=-bound2, maxval=bound2, dtype=jnp.float32)
    b2 = jax.random.uniform(k_b2, (out2,),
                            minval=-bound2, maxval=bound2, dtype=jnp.float32)
    h2 = jax.random.normal(k_h2, (N2, in2), dtype=jnp.float32)
    ref2 = jnp.maximum(h2 @ w2 + b2, 0.0)

    out2_f32 = jax.block_until_ready(
        node_apply(h2, w2, b2, compute_dtype=jnp.float32))
    assert out2_f32.shape == (N2, out2)
    assert jnp.allclose(out2_f32, ref2, atol=2e-3, rtol=2e-3)

    out2_bf16 = jax.block_until_ready(node_apply(h2, w2, b2))
    assert out2_bf16.shape == (N2, out2)
    assert jnp.allclose(out2_bf16, ref2, atol=5e-2, rtol=5e-2)

    print("KERNEL_OK")
</pallas_src>

<mosaic_0001>
module attributes {stable_mosaic.version = 11 : i64} {
  func.func @_node_apply_kernel(%arg0: i32, %arg1: i32, %arg2: memref<1000x32xf32, #tpu.memory_space<vmem>>, %arg3: memref<32x48xf32, #tpu.memory_space<vmem>>, %arg4: memref<1x48xf32, #tpu.memory_space<vmem>>, %arg5: memref<1000x48xf32, #tpu.memory_space<vmem>>) attributes {dimension_semantics = [#tpu.dimension_semantics<parallel>, #tpu.dimension_semantics<parallel>], iteration_bounds = array<i64: 1, 1>, scalar_prefetch = 0 : i64, scratch_operands = 0 : i64, tpu.core_type = #tpu.core_type<tc>, window_params = [{transform_indices = @transform_0, window_bounds = array<i64: 1000, 32>}, {pipeline_mode = #tpu.pipeline_mode<synchronous>, transform_indices = @transform_1, window_bounds = array<i64: 32, 48>}, {pipeline_mode = #tpu.pipeline_mode<synchronous>, transform_indices = @transform_2, window_bounds = array<i64: 1, 48>}, {transform_indices = @transform_3, window_bounds = array<i64: 1000, 48>}]} {
    %c0 = arith.constant 0 : index
    %c0_0 = arith.constant 0 : index
    %0 = vector.load %arg2[%c0, %c0_0] : memref<1000x32xf32, #tpu.memory_space<vmem>>, vector<1000x32xf32>
    %c0_1 = arith.constant 0 : index
    %c0_2 = arith.constant 0 : index
    %1 = vector.load %arg3[%c0_1, %c0_2] : memref<32x48xf32, #tpu.memory_space<vmem>>, vector<32x48xf32>
    %cst = arith.constant dense<0.000000e+00> : vector<1000x48xf32>
    %2 = tpu.matmul %0, %1, %cst {dimension_numbers = #tpu.dot_dimension_numbers<[1], [0], [0], [1], [0, 0, 1, 1], [], []>} : vector<1000x32xf32>, vector<32x48xf32>, vector<1000x48xf32> -> vector<1000x48xf32>
    %c0_3 = arith.constant 0 : index
    %c0_4 = arith.constant 0 : index
    %3 = vector.load %arg4[%c0_3, %c0_4] : memref<1x48xf32, #tpu.memory_space<vmem>>, vector<1x48xf32>
    %4 = vector.broadcast %3 : vector<1x48xf32> to vector<1000x48xf32>
    %5 = arith.addf %2, %4 : vector<1000x48xf32>
    %cst_5 = arith.constant 0.000000e+00 : f32
    %6 = vector.broadcast %cst_5 : f32 to vector<1000x48xf32>
    %7 = arith.maximumf %5, %6 : vector<1000x48xf32>
    %c0_6 = arith.constant 0 : index
    %c0_7 = arith.constant 0 : index
    %8 = vector.load %arg5[%c0_6, %c0_7] : memref<1000x48xf32, #tpu.memory_space<vmem>>, vector<1000x48xf32>
    tpu.vector_store %arg5[%c0_6, %c0_7], %7 {strides = array<i32>} : memref<1000x48xf32, #tpu.memory_space<vmem>>, vector<1000x48xf32>,
    return
  }
  func.func @transform_0(%arg0: i32, %arg1: i32) -> (i32, i32) {
    %c0_i32 = arith.constant 0 : i32
    %c0_i32_0 = arith.constant 0 : i32
    return %arg1, %c0_i32 : i32, i32
  }
  func.func @transform_1(%arg0: i32, %arg1: i32) -> (i32, i32) {
    %c0_i32 = arith.constant 0 : i32
    %c0_i32_0 = arith.constant 0 : i32
    return %c0_i32, %arg0 : i32, i32
  }
  func.func @transform_2(%arg0: i32, %arg1: i32) -> (i32, i32) {
    %c0_i32 = arith.constant 0 : i32
    %c0_i32_0 = arith.constant 0 : i32
    return %c0_i32, %arg0 : i32, i32
  }
  func.func @transform_3(%arg0: i32, %arg1: i32) -> (i32, i32) {
    %c0_i32 = arith.constant 0 : i32
    return %arg1, %arg0 : i32, i32
  }
}

module attributes {stable_mosaic.version = 11 : i64} {
  func.func @_node_apply_kernel(%arg0: i32, %arg1: i32, %arg2: memref<1000x32xf32, #tpu.memory_space<vmem>>, %arg3: memref<32x48xf32, #tpu.memory_space<vmem>>, %arg4: memref<1x48xf32, #tpu.memory_space<vmem>>, %arg5: memref<1000x48xf32, #tpu.memory_space<vmem>>) attributes {dimension_semantics = [#tpu.dimension_semantics<parallel>, #tpu.dimension_semantics<parallel>], iteration_bounds = array<i64: 1, 1>, scalar_prefetch = 0 : i64, scratch_operands = 0 : i64, tpu.core_type = #tpu.core_type<tc>, window_params = [{transform_indices = @transform_0, window_bounds = array<i64: 1000, 32>}, {transform_indices = @transform_1, window_bounds = array<i64: 32, 48>}, {transform_indices = @transform_2, window_bounds = array<i64: 1, 48>}, {transform_indices = @transform_3, window_bounds = array<i64: 1000, 48>}]} {
    %c0 = arith.constant 0 : index
    %c0_0 = arith.constant 0 : index
    %0 = vector.load %arg2[%c0, %c0_0] : memref<1000x32xf32, #tpu.memory_space<vmem>>, vector<1000x32xf32>
    %c0_1 = arith.constant 0 : index
    %c0_2 = arith.constant 0 : index
    %1 = vector.load %arg3[%c0_1, %c0_2] : memref<32x48xf32, #tpu.memory_space<vmem>>, vector<32x48xf32>
    %cst = arith.constant dense<0.000000e+00> : vector<1000x48xf32>
    %2 = tpu.matmul %0, %1, %cst {dimension_numbers = #tpu.dot_dimension_numbers<[1], [0], [0], [1], [0, 0, 1, 1], [], []>} : vector<1000x32xf32>, vector<32x48xf32>, vector<1000x48xf32> -> vector<1000x48xf32>
    %c0_3 = arith.constant 0 : index
    %c0_4 = arith.constant 0 : index
    %3 = vector.load %arg4[%c0_3, %c0_4] : memref<1x48xf32, #tpu.memory_space<vmem>>, vector<1x48xf32>
    %4 = vector.broadcast %3 : vector<1x48xf32> to vector<1000x48xf32>
    %5 = arith.addf %2, %4 : vector<1000x48xf32>
    %cst_5 = arith.constant 0.000000e+00 : f32
    %6 = vector.broadcast %cst_5 : f32 to vector<1000x48xf32>
    %7 = arith.maximumf %5, %6 : vector<1000x48xf32>
    %c0_6 = arith.constant 0 : index
    %c0_7 = arith.constant 0 : index
    %8 = vector.load %arg5[%c0_6, %c0_7] : memref<1000x48xf32, #tpu.memory_space<vmem>>, vector<1000x48xf32>
    tpu.vector_store %arg5[%c0_6, %c0_7], %7 {strides = array<i32>} : memref<1000x48xf32, #tpu.memory_space<vmem>>, vector<1000x48xf32>,
    return
  }
  func.func @transform_0(%arg0: i32, %arg1: i32) -> (i32, i32) {
    %c0_i32 = arith.constant 0 : i32
    %c0_i32_0 = arith.constant 0 : i32
    return %arg1, %c0_i32 : i32, i32
  }
  func.func @transform_1(%arg0: i32, %arg1: i32) -> (i32, i32) {
    %c0_i32 = arith.constant 0 : i32
    %c0_i32_0 = arith.constant 0 : i32
    return %c0_i32, %arg0 : i32, i32
  }
  func.func @transform_2(%arg0: i32, %arg1: i32) -> (i32, i32) {
    %c0_i32 = arith.constant 0 : i32
    %c0_i32_0 = arith.constant 0 : i32
    return %c0_i32, %arg0 : i32, i32
  }
  func.func @transform_3(%arg0: i32, %arg1: i32) -> (i32, i32) {
    %c0_i32 = arith.constant 0 : i32
    return %arg1, %arg0 : i32, i32
  }
}

</mosaic_0001>

<llo_original>
// kernel: tpu_custom_call.1
$region0: #{tpu_custom_call.1}
  #allocation0 [shape = 'u32[]', space=smem, size = 0x4, offset = 0x4, fixed_abs, tag = 'smem constant byte address 0x4 - core index']
  #allocation1 [shape = 'u32[144,128]{1,0:T(1,128)}', space=vmem, size = 0x12000, scoped, tag = 'internal scratch']
  %s0 = inlined_call_operand.vmem [shape: f32[1000,32], index: 0, kind: input, shape index: {}]
  %s1 = inlined_call_operand.vmem [shape: f32[32,48], index: 1, kind: input, shape index: {}]
  %s2 = inlined_call_operand.vmem [shape: f32[1,48], index: 2, kind: input, shape index: {}]
  %s3 = inlined_call_operand.vmem [shape: f32[1000,48], index: 3, kind: output, shape index: {}]
  %s4 = sld [smem:[#allocation0]]
  $region22: #{tpu_custom_call.1} parent=0
    _
  %s6 = ssub.s32 1, %s4
  %s7 = scalar_select 0, %s6, %s4
  // Predicated region
  $region2: #{tpu_custom_call.1} parent=0 // pred_check
    _
  $region3: #{tpu_custom_call.1} parent=0 // pred_check_branch
    %9 = sbr.rel (0) target = $region5
  $region4: #{tpu_custom_call.1} parent=0 // pred_region
    _
  $region5: #{tpu_custom_call.1} parent=0 // pred_fallthru
    _
  // Predicated region
  $region6: #{tpu_custom_call.1} parent=0 // pred_check
    _
  $region7: #{tpu_custom_call.1} parent=0 // pred_check_branch
    %11 = sbr.rel (0) target = $region9
  $region8: #{tpu_custom_call.1} parent=0 // pred_region
    _
  $region9: #{tpu_custom_call.1} parent=0 // pred_fallthru
    _
  // Predicated region
  $region10: #{tpu_custom_call.1} parent=0 // pred_check
    _
  $region11: #{tpu_custom_call.1} parent=0 // pred_check_branch
    %13 = sbr.rel (0) target = $region13
  $region12: #{tpu_custom_call.1} parent=0 // pred_region
    _
  $region13: #{tpu_custom_call.1} parent=0 // pred_fallthru
    _
  %v14 = vld [vmem:[%s0] sm:$0xff]
  %v15 = vld [vmem:[%s0 + $0x8] sm:$0xff]
  %v16 = vld [vmem:[%s0 + $0x10] sm:$0xff]
  %v17 = vld [vmem:[%s0 + $0x18] sm:$0xff]
  %v18 = vld [vmem:[%s0 + $0x20] sm:$0xff]
  %v19 = vld [vmem:[%s0 + $0x28] sm:$0xff]
  %v20 = vld [vmem:[%s0 + $0x30] sm:$0xff]
  %v21 = vld [vmem:[%s0 + $0x38] sm:$0xff]
  %v22 = vld [vmem:[%s0 + $0x40] sm:$0xff]
  %v23 = vld [vmem:[%s0 + $0x48] sm:$0xff]
  %v24 = vld [vmem:[%s0 + $0x50] sm:$0xff]
  %v25 = vld [vmem:[%s0 + $0x58] sm:$0xff]
  %v26 = vld [vmem:[%s0 + $0x60] sm:$0xff]
  %v27 = vld [vmem:[%s0 + $0x68] sm:$0xff]
  %v28 = vld [vmem:[%s0 + $0x70] sm:$0xff]
  %v29 = vld [vmem:[%s0 + $0x78] sm:$0xff]
  %v30 = vld [vmem:[%s0 + $0x80] sm:$0xff]
  %v31 = vld [vmem:[%s0 + $0x88] sm:$0xff]
  %v32 = vld [vmem:[%s0 + $0x90] sm:$0xff]
  %v33 = vld [vmem:[%s0 + $0x98] sm:$0xff]
  %v34 = vld [vmem:[%s0 + $0xa0] sm:$0xff]
  %v35 = vld [vmem:[%s0 + $0xa8] sm:$0xff]
  %v36 = vld [vmem:[%s0 + $0xb0] sm:$0xff]
  %v37 = vld [vmem:[%s0 + $0xb8] sm:$0xff]
  %v38 = vld [vmem:[%s0 + $0xc0] sm:$0xff]
  %v39 = vld [vmem:[%s0 + $0xc8] sm:$0xff]
  %v40 = vld [vmem:[%s0 + $0xd0] sm:$0xff]
  %v41 = vld [vmem:[%s0 + $0xd8] sm:$0xff]
  %v42 = vld [vmem:[%s0 + $0xe0] sm:$0xff]
  %v43 = vld [vmem:[%s0 + $0xe8] sm:$0xff]
  %v44 = vld [vmem:[%s0 + $0xf0] sm:$0xff]
  %v45 = vld [vmem:[%s0 + $0xf8] sm:$0xff]
  %v46 = vld [vmem:[%s0 + $0x100] sm:$0xff]
  %v47 = vld [vmem:[%s0 + $0x108] sm:$0xff]
  %v48 = vld [vmem:[%s0 + $0x110] sm:$0xff]
  %v49 = vld [vmem:[%s0 + $0x118] sm:$0xff]
  %v50 = vld [vmem:[%s0 + $0x120] sm:$0xff]
  %v51 = vld [vmem:[%s0 + $0x128] sm:$0xff]
  %v52 = vld [vmem:[%s0 + $0x130] sm:$0xff]
  %v53 = vld [vmem:[%s0 + $0x138] sm:$0xff]
  %v54 = vld [vmem:[%s0 + $0x140] sm:$0xff]
  %v55 = vld [vmem:[%s0 + $0x148] sm:$0xff]
  %v56 = vld [vmem:[%s0 + $0x150] sm:$0xff]
  %v57 = vld [vmem:[%s0 + $0x158] sm:$0xff]
  %v58 = vld [vmem:[%s0 + $0x160] sm:$0xff]
  %v59 = vld [vmem:[%s0 + $0x168] sm:$0xff]
  %v60 = vld [vmem:[%s0 + $0x170] sm:$0xff]
  %v61 = vld [vmem:[%s0 + $0x178] sm:$0xff]
  %v62 = vld [vmem:[%s0 + $0x180] sm:$0xff]
  %v63 = vld [vmem:[%s0 + $0x188] sm:$0xff]
  %v64 = vld [vmem:[%s0 + $0x190] sm:$0xff]
  %v65 = vld [vmem:[%s0 + $0x198] sm:$0xff]
  %v66 = vld [vmem:[%s0 + $0x1a0] sm:$0xff]
  %v67 = vld [vmem:[%s0 + $0x1a8] sm:$0xff]
  %v68 = vld [vmem:[%s0 + $0x1b0] sm:$0xff]
  %v69 = vld [vmem:[%s0 + $0x1b8] sm:$0xff]
  %v70 = vld [vmem:[%s0 + $0x1c0] sm:$0xff]
  %v71 = vld [vmem:[%s0 + $0x1c8] sm:$0xff]
  %v72 = vld [vmem:[%s0 + $0x1d0] sm:$0xff]
  %v73 = vld [vmem:[%s0 + $0x1d8] sm:$0xff]
  %v74 = vld [vmem:[%s0 + $0x1e0] sm:$0xff]
  %v75 = vld [vmem:[%s0 + $0x1e8] sm:$0xff]
  %v76 = vld [vmem:[%s0 + $0x1f0] sm:$0xff]
  %v77 = vld [vmem:[%s0 + $0x1f8] sm:$0xff]
  %v78 = vld [vmem:[%s0 + $0x200] sm:$0xff]
  %v79 = vld [vmem:[%s0 + $0x208] sm:$0xff]
  %v80 = vld [vmem:[%s0 + $0x210] sm:$0xff]
  %v81 = vld [vmem:[%s0 + $0x218] sm:$0xff]
  %v82 = vld [vmem:[%s0 + $0x220] sm:$0xff]
  %v83 = vld [vmem:[%s0 + $0x228] sm:$0xff]
  %v84 = vld [vmem:[%s0 + $0x230] sm:$0xff]
  %v85 = vld [vmem:[%s0 + $0x238] sm:$0xff]
  %v86 = vld [vmem:[%s0 + $0x240] sm:$0xff]
  %v87 = vld [vmem:[%s0 + $0x248] sm:$0xff]
  %v88 = vld [vmem:[%s0 + $0x250] sm:$0xff]
  %v89 = vld [vmem:[%s0 + $0x258] sm:$0xff]
  %v90 = vld [vmem:[%s0 + $0x260] sm:$0xff]
  %v91 = vld [vmem:[%s0 + $0x268] sm:$0xff]
  %v92 = vld [vmem:[%s0 + $0x270] sm:$0xff]
  %v93 = vld [vmem:[%s0 + $0x278] sm:$0xff]
  %v94 = vld [vmem:[%s0 + $0x280] sm:$0xff]
  %v95 = vld [vmem:[%s0 + $0x288] sm:$0xff]
  %v96 = vld [vmem:[%s0 + $0x290] sm:$0xff]
  %v97 = vld [vmem:[%s0 + $0x298] sm:$0xff]
  %v98 = vld [vmem:[%s0 + $0x2a0] sm:$0xff]
  %v99 = vld [vmem:[%s0 + $0x2a8] sm:$0xff]
  %v100 = vld [vmem:[%s0 + $0x2b0] sm:$0xff]
  %v101 = vld [vmem:[%s0 + $0x2b8] sm:$0xff]
  %v102 = vld [vmem:[%s0 + $0x2c0] sm:$0xff]
  %v103 = vld [vmem:[%s0 + $0x2c8] sm:$0xff]
  %v104 = vld [vmem:[%s0 + $0x2d0] sm:$0xff]
  %v105 = vld [vmem:[%s0 + $0x2d8] sm:$0xff]
  %v106 = vld [vmem:[%s0 + $0x2e0] sm:$0xff]
  %v107 = vld [vmem:[%s0 + $0x2e8] sm:$0xff]
  %v108 = vld [vmem:[%s0 + $0x2f0] sm:$0xff]
  %v109 = vld [vmem:[%s0 + $0x2f8] sm:$0xff]
  %v110 = vld [vmem:[%s0 + $0x300] sm:$0xff]
  %v111 = vld [vmem:[%s0 + $0x308] sm:$0xff]
  %v112 = vld [vmem:[%s0 + $0x310] sm:$0xff]
  %v113 = vld [vmem:[%s0 + $0x318] sm:$0xff]
  %v114 = vld [vmem:[%s0 + $0x320] sm:$0xff]
  %v115 = vld [vmem:[%s0 + $0x328] sm:$0xff]
  %v116 = vld [vmem:[%s0 + $0x330] sm:$0xff]
  %v117 = vld [vmem:[%s0 + $0x338] sm:$0xff]
  %v118 = vld [vmem:[%s0 + $0x340] sm:$0xff]
  %v119 = vld [vmem:[%s0 + $0x348] sm:$0xff]
  %v120 = vld [vmem:[%s0 + $0x350] sm:$0xff]
  %v121 = vld [vmem:[%s0 + $0x358] sm:$0xff]
  %v122 = vld [vmem:[%s0 + $0x360] sm:$0xff]
  %v123 = vld [vmem:[%s0 + $0x368] sm:$0xff]
  %v124 = vld [vmem:[%s0 + $0x370] sm:$0xff]
  %v125 = vld [vmem:[%s0 + $0x378] sm:$0xff]
  %v126 = vld [vmem:[%s0 + $0x380] sm:$0xff]
  %v127 = vld [vmem:[%s0 + $0x388] sm:$0xff]
  %v128 = vld [vmem:[%s0 + $0x390] sm:$0xff]
  %v129 = vld [vmem:[%s0 + $0x398] sm:$0xff]
  %v130 = vld [vmem:[%s0 + $0x3a0] sm:$0xff]
  %v131 = vld [vmem:[%s0 + $0x3a8] sm:$0xff]
  %v132 = vld [vmem:[%s0 + $0x3b0] sm:$0xff]
  %v133 = vld [vmem:[%s0 + $0x3b8] sm:$0xff]
  %v134 = vld [vmem:[%s0 + $0x3c0] sm:$0xff]
  %v135 = vld [vmem:[%s0 + $0x3c8] sm:$0xff]
  %v136 = vld [vmem:[%s0 + $0x3d0] sm:$0xff]
  %v137 = vld [vmem:[%s0 + $0x3d8] sm:$0xff]
  %v138 = vld [vmem:[%s0 + $0x3e0] sm:$0xff]
  %v139 = vld [vmem:[%s1] sm:$0xff]
  %v140 = vld [vmem:[%s1 + $0x8] sm:$0xff]
  %v141 = vld [vmem:[%s1 + $0x10] sm:$0xff]
  %v142 = vld [vmem:[%s1 + $0x18] sm:$0xff]
  %v143 = vld [vmem:[%s2] sm:$0x1]
  %v145 = vlaneseq
  %v146 = vshrl.u32 %v145, 7
  %v147 = vsub.s32 0, %v146
  %v148 = vrot.slane %v143, %v147
  %vm150 = vcmask 261120
  %v152 = vsel %vm150, %v14, 0
  %v155 = vsel %vm150, %v15, 0
  %v158 = vsel %vm150, %v16, 0
  %v161 = vsel %vm150, %v17, 0
  %v164 = vsel %vm150, %v18, 0
  %v167 = vsel %vm150, %v19, 0
  %v170 = vsel %vm150, %v20, 0
  %v173 = vsel %vm150, %v21, 0
  %v176 = vsel %vm150, %v22, 0
  %v179 = vsel %vm150, %v23, 0
  %v182 = vsel %vm150, %v24, 0
  %v185 = vsel %vm150, %v25, 0
  %v188 = vsel %vm150, %v26, 0
  %v191 = vsel %vm150, %v27, 0
  %v194 = vsel %vm150, %v28, 0
  %v197 = vsel %vm150, %v29, 0
  %v200 = vsel %vm150, %v30, 0
  %v203 = vsel %vm150, %v31, 0
  %v206 = vsel %vm150, %v32, 0
  %v209 = vsel %vm150, %v33, 0
  %v212 = vsel %vm150, %v34, 0
  %v215 = vsel %vm150, %v35, 0
  %v218 = vsel %vm150, %v36, 0
  %v221 = vsel %vm150, %v37, 0
  %v224 = vsel %vm150, %v38, 0
  %v227 = vsel %vm150, %v39, 0
  %v230 = vsel %vm150, %v40, 0
  %v233 = vsel %vm150, %v41, 0
  %v236 = vsel %vm150, %v42, 0
  %v239 = vsel %vm150, %v43, 0
  %v242 = vsel %vm150, %v44, 0
  %v245 = vsel %vm150, %v45, 0
  %v248 = vsel %vm150, %v46, 0
  %v251 = vsel %vm150, %v47, 0
  %v254 = vsel %vm150, %v48, 0
  %v257 = vsel %vm150, %v49, 0
  %v260 = vsel %vm150, %v50, 0
  %v263 = vsel %vm150, %v51, 0
  %v266 = vsel %vm150, %v52, 0
  %v269 = vsel %vm150, %v53, 0
  %v272 = vsel %vm150, %v54, 0
  %v275 = vsel %vm150, %v55, 0
  %v278 = vsel %vm150, %v56, 0
  %v281 = vsel %vm150, %v57, 0
  %v284 = vsel %vm150, %v58, 0
  %v287 = vsel %vm150, %v59, 0
  %v290 = vsel %vm150, %v60, 0
  %v293 = vsel %vm150, %v61, 0
  %v296 = vsel %vm150, %v62, 0
  %v299 = vsel %vm150, %v63, 0
  %v302 = vsel %vm150, %v64, 0
  %v305 = vsel %vm150, %v65, 0
  %v308 = vsel %vm150, %v66, 0
  %v311 = vsel %vm150, %v67, 0
  %v314 = vsel %vm150, %v68, 0
  %v317 = vsel %vm150, %v69, 0
  %v320 = vsel %vm150, %v70, 0
  %v323 = vsel %vm150, %v71, 0
  %v326 = vsel %vm150, %v72, 0
  %v329 = vsel %vm150, %v73, 0
  %v332 = vsel %vm150, %v74, 0
  %v335 = vsel %vm150, %v75, 0
  %v338 = vsel %vm150, %v76, 0
  %v341 = vsel %vm150, %v77, 0
  %v344 = vsel %vm150, %v78, 0
  %v347 = vsel %vm150, %v79, 0
  %v350 = vsel %vm150, %v80, 0
  %v353 = vsel %vm150, %v81, 0
  %v356 = vsel %vm150, %v82, 0
  %v359 = vsel %vm150, %v83, 0
  %v362 = vsel %vm150, %v84, 0
  %v365 = vsel %vm150, %v85, 0
  %v368 = vsel %vm150, %v86, 0
  %v371 = vsel %vm150, %v87, 0
  %v374 = vsel %vm150, %v88, 0
  %v377 = vsel %vm150, %v89, 0
  %v380 = vsel %vm150, %v90, 0
  %v383 = vsel %vm150, %v91, 0
  %v386 = vsel %vm150, %v92, 0
  %v389 = vsel %vm150, %v93, 0
  %v392 = vsel %vm150, %v94, 0
  %v395 = vsel %vm150, %v95, 0
  %v398 = vsel %vm150, %v96, 0
  %v401 = vsel %vm150, %v97, 0
  %v404 = vsel %vm150, %v98, 0
  %v407 = vsel %vm150, %v99, 0
  %v410 = vsel %vm150, %v100, 0
  %v413 = vsel %vm150, %v101, 0
  %v416 = vsel %vm150, %v102, 0
  %v419 = vsel %vm150, %v103, 0
  %v422 = vsel %vm150, %v104, 0
  %v425 = vsel %vm150, %v105, 0
  %v428 = vsel %vm150, %v106, 0
  %v431 = vsel %vm150, %v107, 0
  %v434 = vsel %vm150, %v108, 0
  %v437 = vsel %vm150, %v109, 0
  %v440 = vsel %vm150, %v110, 0
  %v443 = vsel %vm150, %v111, 0
  %v446 = vsel %vm150, %v112, 0
  %v449 = vsel %vm150, %v113, 0
  %v452 = vsel %vm150, %v114, 0
  %v455 = vsel %vm150, %v115, 0
  %v458 = vsel %vm150, %v116, 0
  %v461 = vsel %vm150, %v117, 0
  %v464 = vsel %vm150, %v118, 0
  %v467 = vsel %vm150, %v119, 0
  %v470 = vsel %vm150, %v120, 0
  %v473 = vsel %vm150, %v121, 0
  %v476 = vsel %vm150, %v122, 0
  %v479 = vsel %vm150, %v123, 0
  %v482 = vsel %vm150, %v124, 0
  %v485 = vsel %vm150, %v125, 0
  %v488 = vsel %vm150, %v126, 0
  %v491 = vsel %vm150, %v127, 0
  %v494 = vsel %vm150, %v128, 0
  %v497 = vsel %vm150, %v129, 0
  %v500 = vsel %vm150, %v130, 0
  %v503 = vsel %vm150, %v131, 0
  %v506 = vsel %vm150, %v132, 0
  %v509 = vsel %vm150, %v133, 0
  %v512 = vsel %vm150, %v134, 0
  %v515 = vsel %vm150, %v135, 0
  %v518 = vsel %vm150, %v136, 0
  %v521 = vsel %vm150, %v137, 0
  %v524 = vsel %vm150, %v138, 0
  %526 = vmatprep.subr.mxu0 0.0
  %527 = vmatpush1.msra.mxu0 %v139
  %528 = vmatprep.subr.mxu0 0.0
  %529 = vmatpush1.msra.mxu0 %v140
  %530 = vmatprep.subr.mxu0 0.0
  %531 = vmatpush1.msra.mxu0 %v141
  %532 = vmatprep.subr.mxu0 0.0
  %533 = vmatpush1.msra.mxu0 %v142
  %534 = vmatprep.subr.mxu0 0.0
  %535 = vmatpush1.msra.mxu0 0.0
  %536 = vmatprep.subr.mxu0 0.0
  %537 = vmatpush1.msra.mxu0 0.0
  %538 = vmatprep.subr.mxu0 0.0
  %539 = vmatpush1.msra.mxu0 0.0
  %540 = vmatprep.subr.mxu0 0.0
  %541 = vmatpush1.msra.mxu0 0.0
  %542 = vmatprep.subr.mxu0 0.0
  %543 = vmatpush1.msra.mxu0 0.0
  %544 = vmatprep.subr.mxu0 0.0
  %545 = vmatpush1.msra.mxu0 0.0
  %546 = vmatprep.subr.mxu0 0.0
  %547 = vmatpush1.msra.mxu0 0.0
  %548 = vmatprep.subr.mxu0 0.0
  %549 = vmatpush1.msra.mxu0 0.0
  %550 = vmatprep.subr.mxu0 0.0
  %551 = vmatpush1.msra.mxu0 0.0
  %552 = vmatprep.subr.mxu0 0.0
  %553 = vmatpush1.msra.mxu0 0.0
  %554 = vmatprep.subr.mxu0 0.0
  %555 = vmatpush1.msra.mxu0 0.0
  %556 = vmatprep.subr.mxu0 0.0
  %557 = vmatpush1.msra.mxu0 0.0
  %558 = vmatprep.subr.mxu0 0.0
  %559 = vmatpush1.msra.mxu0 0.0
  %560 = vmatprep.subr.mxu0 0.0
  %561 = vmatpush1.msra.mxu0 0.0
  %562 = vmatprep.subr.mxu0 0.0
  %563 = vmatpush1.msra.mxu0 0.0
  %564 = vmatprep.subr.mxu0 0.0
  %565 = vmatpush1.msra.mxu0 0.0
  %566 = vmatprep.subr.mxu0 0.0
  %567 = vmatpush1.msra.mxu0 0.0
  %568 = vmatprep.subr.mxu0 0.0
  %569 = vmatpush1.msra.mxu0 0.0
  %570 = vmatprep.subr.mxu0 0.0
  %571 = vmatpush1.msra.mxu0 0.0
  %572 = vmatprep.subr.mxu0 0.0
  %573 = vmatpush1.msra.mxu0 0.0
  %574 = vmatprep.subr.mxu0 0.0
  %575 = vmatpush1.msra.mxu0 0.0
  %576 = vmatprep.subr.mxu0 0.0
  %577 = vmatpush1.msra.mxu0 0.0
  %578 = vmatprep.subr.mxu0 0.0
  %579 = vmatpush1.msra.mxu0 0.0
  %580 = vmatprep.subr.mxu0 0.0
  %581 = vmatpush1.msra.mxu0 0.0
  %582 = vmatprep.subr.mxu0 0.0
  %583 = vmatpush1.msra.mxu0 0.0
  %584 = vmatprep.subr.mxu0 0.0
  %585 = vmatpush1.msra.mxu0 0.0
  %586 = vmatprep.subr.mxu0 0.0
  %587 = vmatpush1.msra.mxu0 0.0
  %588 = vmatprep.subr.mxu0 0.0
  %589 = vmatpush1.msra.mxu0 0.0
  %590 = vmatprep.mubr.f32.mxu0 0.0
  %591 = vmatmul.mubr.f32.gmra.mrb[0].mxu0 %v152
  %v592 = vpop.f32.mrb[0].mxu0
  %v593 = vadd.f32 %v148, %v592
  %v594 = vpop.f32.mrb[0].mxu0
  %595 = vmatprep.mubr.f32.mxu0 0.0
  %596 = vmatmul.mubr.f32.gmra.mrb[0].mxu0 %v155
  %v597 = vpop.f32.mrb[0].mxu0
  %v598 = vadd.f32 %v148, %v597
  %v599 = vpop.f32.mrb[0].mxu0
  %600 = vmatprep.mubr.f32.mxu0 0.0
  %601 = vmatmul.mubr.f32.gmra.mrb[0].mxu0 %v158
  %v602 = vpop.f32.mrb[0].mxu0
  %v603 = vadd.f32 %v148, %v602
  %v604 = vpop.f32.mrb[0].mxu0
  %605 = vmatprep.mubr.f32.mxu0 0.0
  %606 = vmatmul.mubr.f32.gmra.mrb[0].mxu0 %v161
  %v607 = vpop.f32.mrb[0].mxu0
  %v608 = vadd.f32 %v148, %v607
  %v609 = vpop.f32.mrb[0].mxu0
  %610 = vmatprep.mubr.f32.mxu0 0.0
  %611 = vmatmul.mubr.f32.gmra.mrb[0].mxu0 %v164
  %v612 = vpop.f32.mrb[0].mxu0
  %v613 = vadd.f32 %v148, %v612
  %v614 = vpop.f32.mrb[0].mxu0
  %615 = vmatprep.mubr.f32.mxu0 0.0
  %616 = vmatmul.mubr.f32.gmra.mrb[0].mxu0 %v167
  %v617 = vpop.f32.mrb[0].mxu0
  %v618 = vadd.f32 %v148, %v617
  %v619 = vpop.f32.mrb[0].mxu0
  %620 = vmatprep.mubr.f32.mxu0 0.0
  %621 = vmatmul.mubr.f32.gmra.mrb[0].mxu0 %v170
  %v622 = vpop.f32.mrb[0].mxu0
  %v623 = vadd.f32 %v148, %v622
  %v624 = vpop.f32.mrb[0].mxu0
  %625 = vmatprep.mubr.f32.mxu0 0.0
  %626 = vmatmul.mubr.f32.gmra.mrb[0].mxu0 %v173
  %v627 = vpop.f32.mrb[0].mxu0
  %v628 = vadd.f32 %v148, %v627
  %v629 = vpop.f32.mrb[0].mxu0
  %630 = vmatprep.mubr.f32.mxu0 0.0
  %631 = vmatmul.mubr.f32.gmra.mrb[0].mxu0 %v176
  %v632 = vpop.f32.mrb[0].mxu0
  %v633 = vadd.f32 %v148, %v632
  %v634 = vpop.f32.mrb[0].mxu0
  %635 = vmatprep.mubr.f32.mxu0 0.0
  %636 = vmatmul.mubr.f32.gmra.mrb[0].mxu0 %v179
  %v637 = vpop.f32.mrb[0].mxu0
  %v638 = vadd.f32 %v148, %v637
  %v639 = vpop.f32.mrb[0].mxu0
  %640 = vmatprep.mubr.f32.mxu0 0.0
  %641 = vmatmul.mubr.f32.gmra.mrb[0].mxu0 %v182
  %v642 = vpop.f32.mrb[0].mxu0
  %v643 = vadd.f32 %v148, %v642
  %v644 = vpop.f32.mrb[0].mxu0
  %645 = vmatprep.mubr.f32.mxu0 0.0
  %646 = vmatmul.mubr.f32.gmra.mrb[0].mxu0 %v185
  %v647 = vpop.f32.mrb[0].mxu0
  %v648 = vadd.f32 %v148, %v647
  %v649 = vpop.f32.mrb[0].mxu0
  %650 = vmatprep.mubr.f32.mxu0 0.0
  %651 = vmatmul.mubr.f32.gmra.mrb[0].mxu0 %v188
  %v652 = vpop.f32.mrb[0].mxu0
  %v653 = vadd.f32 %v148, %v652
  %v654 = vpop.f32.mrb[0].mxu0
  %655 = vmatprep.mubr.f32.mxu0 0.0
  %656 = vmatmul.mubr.f32.gmra.mrb[0].mxu0 %v191
  %v657 = vpop.f32.mrb[0].mxu0
  %v658 = vadd.f32 %v148, %v657
  %v659 = vpop.f32.mrb[0].mxu0
  %660 = vmatprep.mubr.f32.mxu0 0.0
  %661 = vmatmul.mubr.f32.gmra.mrb[0].mxu0 %v194
  %v662 = vpop.f32.mrb[0].mxu0
  %v663 = vadd.f32 %v148, %v662
  %v664 = vpop.f32.mrb[0].mxu0
  %665 = vmatprep.mubr.f32.mxu0 0.0
  %666 = vmatmul.mubr.f32.gmra.mrb[0].mxu0 %v197
  %v667 = vpop.f32.mrb[0].mxu0
  %v668 = vadd.f32 %v148, %v667
  %v669 = vpop.f32.mrb[0].mxu0
  %670 = vmatprep.mubr.f32.mxu0 0.0
  %671 = vmatmul.mubr.f32.gmra.mrb[0].mxu0 %v200
  %v672 = vpop.f32.mrb[0].mxu0
  %v673 = vadd.f32 %v148, %v672
  %v674 = vpop.f32.mrb[0].mxu0
  %675 = vmatprep.mubr.f32.mxu0 0.0
  %676 = vmatmul.mubr.f32.gmra.mrb[0].mxu0 %v203
  %v677 = vpop.f32.mrb[0].mxu0
  %v678 = vadd.f32 %v148, %v677
  %v679 = vpop.f32.mrb[0].mxu0
  %680 = vmatprep.mubr.f32.mxu0 0.0
  %681 = vmatmul.mubr.f32.gmra.mrb[0].mxu0 %v206
  %v682 = vpop.f32.mrb[0].mxu0
  %v683 = vadd.f32 %v148, %v682
  %v684 = vpop.f32.mrb[0].mxu0
  %685 = vmatprep.mubr.f32.mxu0 0.0
  %686 = vmatmul.mubr.f32.gmra.mrb[0].mxu0 %v209
  %v687 = vpop.f32.mrb[0].mxu0
  %v688 = vadd.f32 %v148, %v687
  %v689 = vpop.f32.mrb[0].mxu0
  %690 = vmatprep.mubr.f32.mxu0 0.0
  %691 = vmatmul.mubr.f32.gmra.mrb[0].mxu0 %v212
  %v692 = vpop.f32.mrb[0].mxu0
  %v693 = vadd.f32 %v148, %v692
  %v694 = vpop.f32.mrb[0].mxu0
  %695 = vmatprep.mubr.f32.mxu0 0.0
  %696 = vmatmul.mubr.f32.gmra.mrb[0].mxu0 %v215
  %v697 = vpop.f32.mrb[0].mxu0
  %v698 = vadd.f32 %v148, %v697
  %v699 = vpop.f32.mrb[0].mxu0
  %700 = vmatprep.mubr.f32.mxu0 0.0
  %701 = vmatmul.mubr.f32.gmra.mrb[0].mxu0 %v218
  %v702 = vpop.f32.mrb[0].mxu0
  %v703 = vadd.f32 %v148, %v702
  %v704 = vpop.f32.mrb[0].mxu0
  %705 = vmatprep.mubr.f32.mxu0 0.0
  %706 = vmatmul.mubr.f32.gmra.mrb[0].mxu0 %v221
  %v707 = vpop.f32.mrb[0].mxu0
  %v708 = vadd.f32 %v148, %v707
  %v709 = vpop.f32.mrb[0].mxu0
  %710 = vmatprep.mubr.f32.mxu0 0.0
  %711 = vmatmul.mubr.f32.gmra.mrb[0].mxu0 %v224
  %v712 = vpop.f32.mrb[0].mxu0
  %v713 = vadd.f32 %v148, %v712
  %v714 = vpop.f32.mrb[0].mxu0
  %715 = vmatprep.mubr.f32.mxu0 0.0
  %716 = vmatmul.mubr.f32.gmra.mrb[0].mxu0 %v227
  %v717 = vpop.f32.mrb[0].mxu0
  %v718 = vadd.f32 %v148, %v717
  %v719 = vpop.f32.mrb[0].mxu0
  %720 = vmatprep.mubr.f32.mxu0 0.0
  %721 = vmatmul.mubr.f32.gmra.mrb[0].mxu0 %v230
  %v722 = vpop.f32.mrb[0].mxu0
  %v723 = vadd.f32 %v148, %v722
  %v724 = vpop.f32.mrb[0].mxu0
  %725 = vmatprep.mubr.f32.mxu0 0.0
  %726 = vmatmul.mubr.f32.gmra.mrb[0].mxu0 %v233
  %v727 = vpop.f32.mrb[0].mxu0
  %v728 = vadd.f32 %v148, %v727
  %v729 = vpop.f32.mrb[0].mxu0
  %730 = vmatprep.mubr.f32.mxu0 0.0
  %731 = vmatmul.mubr.f32.gmra.mrb[0].mxu0 %v236
  %v732 = vpop.f32.mrb[0].mxu0
  %v733 = vadd.f32 %v148, %v732
  %v734 = vpop.f32.mrb[0].mxu0
  %735 = vmatprep.mubr.f32.mxu0 0.0
  %736 = vmatmul.mubr.f32.gmra.mrb[0].mxu0 %v239
  %v737 = vpop.f32.mrb[0].mxu0
  %v738 = vadd.f32 %v148, %v737
  %v739 = vpop.f32.mrb[0].mxu0
  %740 = vmatprep.mubr.f32.mxu0 0.0
  %741 = vmatmul.mubr.f32.gmra.mrb[0].mxu0 %v242
  %v742 = vpop.f32.mrb[0].mxu0
  %v743 = vadd.f32 %v148, %v742
  %v744 = vpop.f32.mrb[0].mxu0
  %745 = vmatprep.mubr.f32.mxu0 0.0
  %746 = vmatmul.mubr.f32.gmra.mrb[0].mxu0 %v245
  %v747 = vpop.f32.mrb[0].mxu0
  %v748 = vadd.f32 %v148, %v747
  %v749 = vpop.f32.mrb[0].mxu0
  %750 = vmatprep.mubr.f32.mxu0 0.0
  %751 = vmatmul.mubr.f32.gmra.mrb[0].mxu0 %v248
  %v752 = vpop.f32.mrb[0].mxu0
  %v753 = vadd.f32 %v148, %v752
  %v754 = vpop.f32.mrb[0].mxu0
  %755 = vmatprep.mubr.f32.mxu0 0.0
  %756 = vmatmul.mubr.f32.gmra.mrb[0].mxu0 %v251
  %v757 = vpop.f32.mrb[0].mxu0
  %v758 = vadd.f32 %v148, %v757
  %v759 = vpop.f32.mrb[0].mxu0
  %760 = vmatprep.mubr.f32.mxu0 0.0
  %761 = vmatmul.mubr.f32.gmra.mrb[0].mxu0 %v254
  %v762 = vpop.f32.mrb[0].mxu0
  %v763 = vadd.f32 %v148, %v762
  %v764 = vpop.f32.mrb[0].mxu0
  %765 = vmatprep.mubr.f32.mxu0 0.0
  %766 = vmatmul.mubr.f32.gmra.mrb[0].mxu0 %v257
  %v767 = vpop.f32.mrb[0].mxu0
  %v768 = vadd.f32 %v148, %v767
  %v769 = vpop.f32.mrb[0].mxu0
  %770 = vmatprep.mubr.f32.mxu0 0.0
  %771 = vmatmul.mubr.f32.gmra.mrb[0].mxu0 %v260
  %v772 = vpop.f32.mrb[0].mxu0
  %v773 = vadd.f32 %v148, %v772
  %v774 = vpop.f32.mrb[0].mxu0
  %775 = vmatprep.mubr.f32.mxu0 0.0
  %776 = vmatmul.mubr.f32.gmra.mrb[0].mxu0 %v263
  %v777 = vpop.f32.mrb[0].mxu0
  %v778 = vadd.f32 %v148, %v777
  %v779 = vpop.f32.mrb[0].mxu0
  %780 = vmatprep.mubr.f32.mxu0 0.0
  %781 = vmatmul.mubr.f32.gmra.mrb[0].mxu0 %v266
  %v782 = vpop.f32.mrb[0].mxu0
  %v783 = vadd.f32 %v148, %v782
  %v784 = vpop.f32.mrb[0].mxu0
  %785 = vmatprep.mubr.f32.mxu0 0.0
  %786 = vmatmul.mubr.f32.gmra.mrb[0].mxu0 %v269
  %v787 = vpop.f32.mrb[0].mxu0
  %v788 = vadd.f32 %v148, %v787
  %v789 = vpop.f32.mrb[0].mxu0
  %790 = vmatprep.mubr.f32.mxu0 0.0
  %791 = vmatmul.mubr.f32.gmra.mrb[0].mxu0 %v272
  %v792 = vpop.f32.mrb[0].mxu0
  %v793 = vadd.f32 %v148, %v792
  %v794 = vpop.f32.mrb[0].mxu0
  %795 = vmatprep.mubr.f32.mxu0 0.0
  %796 = vmatmul.mubr.f32.gmra.mrb[0].mxu0 %v275
  %v797 = vpop.f32.mrb[0].mxu0
  %v798 = vadd.f32 %v148, %v797
  %v799 = vpop.f32.mrb[0].mxu0
  %800 = vmatprep.mubr.f32.mxu0 0.0
  %801 = vmatmul.mubr.f32.gmra.mrb[0].mxu0 %v278
  %v802 = vpop.f32.mrb[0].mxu0
  %v803 = vadd.f32 %v148, %v802
  %v804 = vpop.f32.mrb[0].mxu0
  %805 = vmatprep.mubr.f32.mxu0 0.0
  %806 = vmatmul.mubr.f32.gmra.mrb[0].mxu0 %v281
  %v807 = vpop.f32.mrb[0].mxu0
  %v808 = vadd.f32 %v148, %v807
  %v809 = vpop.f32.mrb[0].mxu0
  %810 = vmatprep.mubr.f32.mxu0 0.0
  %811 = vmatmul.mubr.f32.gmra.mrb[0].mxu0 %v284
  %v812 = vpop.f32.mrb[0].mxu0
  %v813 = vadd.f32 %v148, %v812
  %v814 = vpop.f32.mrb[0].mxu0
  %815 = vmatprep.mubr.f32.mxu0 0.0
  %816 = vmatmul.mubr.f32.gmra.mrb[0].mxu0 %v287
  %v817 = vpop.f32.mrb[0].mxu0
  %v818 = vadd.f32 %v148, %v817
  %v819 = vpop.f32.mrb[0].mxu0
  %820 = vmatprep.mubr.f32.mxu0 0.0
  %821 = vmatmul.mubr.f32.gmra.mrb[0].mxu0 %v290
  %v822 = vpop.f32.mrb[0].mxu0
  %v823 = vadd.f32 %v148, %v822
  %v824 = vpop.f32.mrb[0].mxu0
  %825 = vmatprep.mubr.f32.mxu0 0.0
  %826 = vmatmul.mubr.f32.gmra.mrb[0].mxu0 %v293
  %v827 = vpop.f32.mrb[0].mxu0
  %v828 = vadd.f32 %v148, %v827
  %v829 = vpop.f32.mrb[0].mxu0
  %830 = vmatprep.mubr.f32.mxu0 0.0
  %831 = vmatmul.mubr.f32.gmra.mrb[0].mxu0 %v296
  %v832 = vpop.f32.mrb[0].mxu0
  %v833 = vadd.f32 %v148, %v832
  %v834 = vpop.f32.mrb[0].mxu0
  %835 = vmatprep.mubr.f32.mxu0 0.0
  %836 = vmatmul.mubr.f32.gmra.mrb[0].mxu0 %v299
  %v837 = vpop.f32.mrb[0].mxu0
  %v838 = vadd.f32 %v148, %v837
  %v839 = vpop.f32.mrb[0].mxu0
  %840 = vmatprep.mubr.f32.mxu0 0.0
  %841 = vmatmul.mubr.f32.gmra.mrb[0].mxu0 %v302
  %v842 = vpop.f32.mrb[0].mxu0
  %v843 = vadd.f32 %v148, %v842
  %v844 = vpop.f32.mrb[0].mxu0
  %845 = vmatprep.mubr.f32.mxu0 0.0
  %846 = vmatmul.mubr.f32.gmra.mrb[0].mxu0 %v305
  %v847 = vpop.f32.mrb[0].mxu0
  %v848 = vadd.f32 %v148, %v847
  %v849 = vpop.f32.mrb[0].mxu0
  %850 = vmatprep.mubr.f32.mxu0 0.0
  %851 = vmatmul.mubr.f32.gmra.mrb[0].mxu0 %v308
  %v852 = vpop.f32.mrb[0].mxu0
  %v853 = vadd.f32 %v148, %v852
  %v854 = vpop.f32.mrb[0].mxu0
  %855 = vmatprep.mubr.f32.mxu0 0.0
  %856 = vmatmul.mubr.f32.gmra.mrb[0].mxu0 %v311
  %v857 = vpop.f32.mrb[0].mxu0
  %v858 = vadd.f32 %v148, %v857
  %v859 = vpop.f32.mrb[0].mxu0
  %860 = vmatprep.mubr.f32.mxu0 0.0
  %861 = vmatmul.mubr.f32.gmra.mrb[0].mxu0 %v314
  %v862 = vpop.f32.mrb[0].mxu0
  %v863 = vadd.f32 %v148, %v862
  %v864 = vpop.f32.mrb[0].mxu0
  %865 = vmatprep.mubr.f32.mxu0 0.0
  %866 = vmatmul.mubr.f32.gmra.mrb[0].mxu0 %v317
  %v867 = vpop.f32.mrb[0].mxu0
  %v868 = vadd.f32 %v148, %v867
  %v869 = vpop.f32.mrb[0].mxu0
  %870 = vmatprep.mubr.f32.mxu0 0.0
  %871 = vmatmul.mubr.f32.gmra.mrb[0].mxu0 %v320
  %v872 = vpop.f32.mrb[0].mxu0
  %v873 = vadd.f32 %v148, %v872
  %v874 = vpop.f32.mrb[0].mxu0
  %875 = vmatprep.mubr.f32.mxu0 0.0
  %876 = vmatmul.mubr.f32.gmra.mrb[0].mxu0 %v323
  %v877 = vpop.f32.mrb[0].mxu0
  %v878 = vadd.f32 %v148, %v877
  %v879 = vpop.f32.mrb[0].mxu0
  %880 = vmatprep.mubr.f32.mxu0 0.0
  %881 = vmatmul.mubr.f32.gmra.mrb[0].mxu0 %v326
  %v882 = vpop.f32.mrb[0].mxu0
  %v883 = vadd.f32 %v148, %v882
  %v884 = vpop.f32.mrb[0].mxu0
  %885 = vmatprep.mubr.f32.mxu0 0.0
  %886 = vmatmul.mubr.f32.gmra.mrb[0].mxu0 %v329
  %v887 = vpop.f32.mrb[0].mxu0
  %v888 = vadd.f32 %v148, %v887
  %v889 = vpop.f32.mrb[0].mxu0
  %890 = vmatprep.mubr.f32.mxu0 0.0
  %891 = vmatmul.mubr.f32.gmra.mrb[0].mxu0 %v332
  %v892 = vpop.f32.mrb[0].mxu0
  %v893 = vadd.f32 %v148, %v892
  %v894 = vpop.f32.mrb[0].mxu0
  %895 = vmatprep.mubr.f32.mxu0 0.0
  %896 = vmatmul.mubr.f32.gmra.mrb[0].mxu0 %v335
  %v897 = vpop.f32.mrb[0].mxu0
  %v898 = vadd.f32 %v148, %v897
  %v899 = vpop.f32.mrb[0].mxu0
  %900 = vmatprep.mubr.f32.mxu0 0.0
  %901 = vmatmul.mubr.f32.gmra.mrb[0].mxu0 %v338
  %v902 = vpop.f32.mrb[0].mxu0
  %v903 = vadd.f32 %v148, %v902
  %v904 = vpop.f32.mrb[0].mxu0
  %905 = vmatprep.mubr.f32.mxu0 0.0
  %906 = vmatmul.mubr.f32.gmra.mrb[0].mxu0 %v341
  %v907 = vpop.f32.mrb[0].mxu0
  %v908 = vadd.f32 %v148, %v907
  %v909 = vpop.f32.mrb[0].mxu0
  %910 = vmatprep.mubr.f32.mxu0 0.0
  %911 = vmatmul.mubr.f32.gmra.mrb[0].mxu0 %v344
  %v912 = vpop.f32.mrb[0].mxu0
  %v913 = vadd.f32 %v148, %v912
  %v914 = vpop.f32.mrb[0].mxu0
  %915 = vmatprep.mubr.f32.mxu0 0.0
  %916 = vmatmul.mubr.f32.gmra.mrb[0].mxu0 %v347
  %v917 = vpop.f32.mrb[0].mxu0
  %v918 = vadd.f32 %v148, %v917
  %v919 = vpop.f32.mrb[0].mxu0
  %920 = vmatprep.mubr.f32.mxu0 0.0
  %921 = vmatmul.mubr.f32.gmra.mrb[0].mxu0 %v350
  %v922 = vpop.f32.mrb[0].mxu0
  %v923 = vadd.f32 %v148, %v922
  %v924 = vpop.f32.mrb[0].mxu0
  %925 = vmatprep.mubr.f32.mxu0 0.0
  %926 = vmatmul.mubr.f32.gmra.mrb[0].mxu0 %v353
  %v927 = vpop.f32.mrb[0].mxu0
  %v928 = vadd.f32 %v148, %v927
  %v929 = vpop.f32.mrb[0].mxu0
  %930 = vmatprep.mubr.f32.mxu0 0.0
  %931 = vmatmul.mubr.f32.gmra.mrb[0].mxu0 %v356
  %v932 = vpop.f32.mrb[0].mxu0
  %v933 = vadd.f32 %v148, %v932
  %v934 = vpop.f32.mrb[0].mxu0
  %935 = vmatprep.mubr.f32.mxu0 0.0
  %936 = vmatmul.mubr.f32.gmra.mrb[0].mxu0 %v359
  %v937 = vpop.f32.mrb[0].mxu0
  %v938 = vadd.f32 %v148, %v937
  %v939 = vpop.f32.mrb[0].mxu0
  %940 = vmatprep.mubr.f32.mxu0 0.0
  %941 = vmatmul.mubr.f32.gmra.mrb[0].mxu0 %v362
  %v942 = vpop.f32.mrb[0].mxu0
  %v943 = vadd.f32 %v148, %v942
  %v944 = vpop.f32.mrb[0].mxu0
  %945 = vmatprep.mubr.f32.mxu0 0.0
  %946 = vmatmul.mubr.f32.gmra.mrb[0].mxu0 %v365
  %v947 = vpop.f32.mrb[0].mxu0
  %v948 = vadd.f32 %v148, %v947
  %v949 = vpop.f32.mrb[0].mxu0
  %950 = vmatprep.mubr.f32.mxu0 0.0
  %951 = vmatmul.mubr.f32.gmra.mrb[0].mxu0 %v368
  %v952 = vpop.f32.mrb[0].mxu0
  %v953 = vadd.f32 %v148, %v952
  %v954 = vpop.f32.mrb[0].mxu0
  %955 = vmatprep.mubr.f32.mxu0 0.0
  %956 = vmatmul.mubr.f32.gmra.mrb[0].mxu0 %v371
  %v957 = vpop.f32.mrb[0].mxu0
  %v958 = vadd.f32 %v148, %v957
  %v959 = vpop.f32.mrb[0].mxu0
  %960 = vmatprep.mubr.f32.mxu0 0.0
  %961 = vmatmul.mubr.f32.gmra.mrb[0].mxu0 %v374
  %v962 = vpop.f32.mrb[0].mxu0
  %v963 = vadd.f32 %v148, %v962
  %v964 = vpop.f32.mrb[0].mxu0
  %965 = vmatprep.mubr.f32.mxu0 0.0
  %966 = vmatmul.mubr.f32.gmra.mrb[0].mxu0 %v377
  %v967 = vpop.f32.mrb[0].mxu0
  %v968 = vadd.f32 %v148, %v967
  %v969 = vpop.f32.mrb[0].mxu0
  %970 = vmatprep.mubr.f32.mxu0 0.0
  %971 = vmatmul.mubr.f32.gmra.mrb[0].mxu0 %v380
  %v972 = vpop.f32.mrb[0].mxu0
  %v973 = vadd.f32 %v148, %v972
  %v974 = vpop.f32.mrb[0].mxu0
  %975 = vmatprep.mubr.f32.mxu0 0.0
  %976 = vmatmul.mubr.f32.gmra.mrb[0].mxu0 %v383
  %v977 = vpop.f32.mrb[0].mxu0
  %v978 = vadd.f32 %v148, %v977
  %v979 = vpop.f32.mrb[0].mxu0
  %980 = vmatprep.mubr.f32.mxu0 0.0
  %981 = vmatmul.mubr.f32.gmra.mrb[0].mxu0 %v386
  %v982 = vpop.f32.mrb[0].mxu0
  %v983 = vadd.f32 %v148, %v982
  %v984 = vpop.f32.mrb[0].mxu0
  %985 = vmatprep.mubr.f32.mxu0 0.0
  %986 = vmatmul.mubr.f32.gmra.mrb[0].mxu0 %v389
  %v987 = vpop.f32.mrb[0].mxu0
  %v988 = vadd.f32 %v148, %v987
  %v989 = vpop.f32.mrb[0].mxu0
  %990 = vmatprep.mubr.f32.mxu0 0.0
  %991 = vmatmul.mubr.f32.gmra.mrb[0].mxu0 %v392
  %v992 = vpop.f32.mrb[0].mxu0
  %v993 = vadd.f32 %v148, %v992
  %v994 = vpop.f32.mrb[0].mxu0
  %995 = vmatprep.mubr.f32.mxu0 0.0
  %996 = vmatmul.mubr.f32.gmra.mrb[0].mxu0 %v395
  %v997 = vpop.f32.mrb[0].mxu0
  %v998 = vadd.f32 %v148, %v997
  %v999 = vpop.f32.mrb[0].mxu0
  %1000 = vmatprep.mubr.f32.mxu0 0.0
  %1001 = vmatmul.mubr.f32.gmra.mrb[0].mxu0 %v398
  %v1002 = vpop.f32.mrb[0].mxu0
  %v1003 = vadd.f32 %v148, %v1002
  %v1004 = vpop.f32.mrb[0].mxu0
  %1005 = vmatprep.mubr.f32.mxu0 0.0
  %1006 = vmatmul.mubr.f32.gmra.mrb[0].mxu0 %v401
  %v1007 = vpop.f32.mrb[0].mxu0
  %v1008 = vadd.f32 %v148, %v1007
  %v1009 = vpop.f32.mrb[0].mxu0
  %1010 = vmatprep.mubr.f32.mxu0 0.0
  %1011 = vmatmul.mubr.f32.gmra.mrb[0].mxu0 %v404
  %v1012 = vpop.f32.mrb[0].mxu0
  %v1013 = vadd.f32 %v148, %v1012
  %v1014 = vpop.f32.mrb[0].mxu0
  %1015 = vmatprep.mubr.f32.mxu0 0.0
  %1016 = vmatmul.mubr.f32.gmra.mrb[0].mxu0 %v407
  %v1017 = vpop.f32.mrb[0].mxu0
  %v1018 = vadd.f32 %v148, %v1017
  %v1019 = vpop.f32.mrb[0].mxu0
  %1020 = vmatprep.mubr.f32.mxu0 0.0
  %1021 = vmatmul.mubr.f32.gmra.mrb[0].mxu0 %v410
  %v1022 = vpop.f32.mrb[0].mxu0
  %v1023 = vadd.f32 %v148, %v1022
  %v1024 = vpop.f32.mrb[0].mxu0
  %1025 = vmatprep.mubr.f32.mxu0 0.0
  %1026 = vmatmul.mubr.f32.gmra.mrb[0].mxu0 %v413
  %v1027 = vpop.f32.mrb[0].mxu0
  %v1028 = vadd.f32 %v148, %v1027
  %v1029 = vpop.f32.mrb[0].mxu0
  %1030 = vmatprep.mubr.f32.mxu0 0.0
  %1031 = vmatmul.mubr.f32.gmra.mrb[0].mxu0 %v416
  %v1032 = vpop.f32.mrb[0].mxu0
  %v1033 = vadd.f32 %v148, %v1032
  %v1034 = vpop.f32.mrb[0].mxu0
  %1035 = vmatprep.mubr.f32.mxu0 0.0
  %1036 = vmatmul.mubr.f32.gmra.mrb[0].mxu0 %v419
  %v1037 = vpop.f32.mrb[0].mxu0
  %v1038 = vadd.f32 %v148, %v1037
  %v1039 = vpop.f32.mrb[0].mxu0
  %1040 = vmatprep.mubr.f32.mxu0 0.0
  %1041 = vmatmul.mubr.f32.gmra.mrb[0].mxu0 %v422
  %v1042 = vpop.f32.mrb[0].mxu0
  %v1043 = vadd.f32 %v148, %v1042
  %v1044 = vpop.f32.mrb[0].mxu0
  %1045 = vmatprep.mubr.f32.mxu0 0.0
  %1046 = vmatmul.mubr.f32.gmra.mrb[0].mxu0 %v425
  %v1047 = vpop.f32.mrb[0].mxu0
  %v1048 = vadd.f32 %v148, %v1047
  %v1049 = vpop.f32.mrb[0].mxu0
  %1050 = vmatprep.mubr.f32.mxu0 0.0
  %1051 = vmatmul.mubr.f32.gmra.mrb[0].mxu0 %v428
  %v1052 = vpop.f32.mrb[0].mxu0
  %v1053 = vadd.f32 %v148, %v1052
  %v1054 = vpop.f32.mrb[0].mxu0
  %1055 = vmatprep.mubr.f32.mxu0 0.0
  %1056 = vmatmul.mubr.f32.gmra.mrb[0].mxu0 %v431
  %v1057 = vpop.f32.mrb[0].mxu0
  %v1058 = vadd.f32 %v148, %v1057
  %v1059 = vpop.f32.mrb[0].mxu0
  %1060 = vmatprep.mubr.f32.mxu0 0.0
  %1061 = vmatmul.mubr.f32.gmra.mrb[0].mxu0 %v434
  %v1062 = vpop.f32.mrb[0].mxu0
  %v1063 = vadd.f32 %v148, %v1062
  %v1064 = vpop.f32.mrb[0].mxu0
  %1065 = vmatprep.mubr.f32.mxu0 0.0
  %1066 = vmatmul.mubr.f32.gmra.mrb[0].mxu0 %v437
  %v1067 = vpop.f32.mrb[0].mxu0
  %v1068 = vadd.f32 %v148, %v1067
  %v1069 = vpop.f32.mrb[0].mxu0
  %1070 = vmatprep.mubr.f32.mxu0 0.0
  %1071 = vmatmul.mubr.f32.gmra.mrb[0].mxu0 %v440
  %v1072 = vpop.f32.mrb[0].mxu0
  %v1073 = vadd.f32 %v148, %v1072
  %v1074 = vpop.f32.mrb[0].mxu0
  %1075 = vmatprep.mubr.f32.mxu0 0.0
  %1076 = vmatmul.mubr.f32.gmra.mrb[0].mxu0 %v443
  %v1077 = vpop.f32.mrb[0].mxu0
  %v1078 = vadd.f32 %v148, %v1077
  %v1079 = vpop.f32.mrb[0].mxu0
  %1080 = vmatprep.mubr.f32.mxu0 0.0
  %1081 = vmatmul.mubr.f32.gmra.mrb[0].mxu0 %v446
  %v1082 = vpop.f32.mrb[0].mxu0
  %v1083 = vadd.f32 %v148, %v1082
  %v1084 = vpop.f32.mrb[0].mxu0
  %1085 = vmatprep.mubr.f32.mxu0 0.0
  %1086 = vmatmul.mubr.f32.gmra.mrb[0].mxu0 %v449
  %v1087 = vpop.f32.mrb[0].mxu0
  %v1088 = vadd.f32 %v148, %v1087
  %v1089 = vpop.f32.mrb[0].mxu0
  %1090 = vmatprep.mubr.f32.mxu0 0.0
  %1091 = vmatmul.mubr.f32.gmra.mrb[0].mxu0 %v452
  %v1092 = vpop.f32.mrb[0].mxu0
  %v1093 = vadd.f32 %v148, %v1092
  %v1094 = vpop.f32.mrb[0].mxu0
  %1095 = vmatprep.mubr.f32.mxu0 0.0
  %1096 = vmatmul.mubr.f32.gmra.mrb[0].mxu0 %v455
  %v1097 = vpop.f32.mrb[0].mxu0
  %v1098 = vadd.f32 %v148, %v1097
  %v1099 = vpop.f32.mrb[0].mxu0
  %1100 = vmatprep.mubr.f32.mxu0 0.0
  %1101 = vmatmul.mubr.f32.gmra.mrb[0].mxu0 %v458
  %v1102 = vpop.f32.mrb[0].mxu0
  %v1103 = vadd.f32 %v148, %v1102
  %v1104 = vpop.f32.mrb[0].mxu0
  %1105 = vmatprep.mubr.f32.mxu0 0.0
  %1106 = vmatmul.mubr.f32.gmra.mrb[0].mxu0 %v461
  %v1107 = vpop.f32.mrb[0].mxu0
  %v1108 = vadd.f32 %v148, %v1107
  %v1109 = vpop.f32.mrb[0].mxu0
  %1110 = vmatprep.mubr.f32.mxu0 0.0
  %1111 = vmatmul.mubr.f32.gmra.mrb[0].mxu0 %v464
  %v1112 = vpop.f32.mrb[0].mxu0
  %v1113 = vadd.f32 %v148, %v1112
  %v1114 = vpop.f32.mrb[0].mxu0
  %1115 = vmatprep.mubr.f32.mxu0 0.0
  %1116 = vmatmul.mubr.f32.gmra.mrb[0].mxu0 %v467
  %v1117 = vpop.f32.mrb[0].mxu0
  %v1118 = vadd.f32 %v148, %v1117
  %v1119 = vpop.f32.mrb[0].mxu0
  %1120 = vmatprep.mubr.f32.mxu0 0.0
  %1121 = vmatmul.mubr.f32.gmra.mrb[0].mxu0 %v470
  %v1122 = vpop.f32.mrb[0].mxu0
  %v1123 = vadd.f32 %v148, %v1122
  %v1124 = vpop.f32.mrb[0].mxu0
  %1125 = vmatprep.mubr.f32.mxu0 0.0
  %1126 = vmatmul.mubr.f32.gmra.mrb[0].mxu0 %v473
  %v1127 = vpop.f32.mrb[0].mxu0
  %v1128 = vadd.f32 %v148, %v1127
  %v1129 = vpop.f32.mrb[0].mxu0
  %1130 = vmatprep.mubr.f32.mxu0 0.0
  %1131 = vmatmul.mubr.f32.gmra.mrb[0].mxu0 %v476
  %v1132 = vpop.f32.mrb[0].mxu0
  %v1133 = vadd.f32 %v148, %v1132
  %v1134 = vpop.f32.mrb[0].mxu0
  %1135 = vmatprep.mubr.f32.mxu0 0.0
  %1136 = vmatmul.mubr.f32.gmra.mrb[0].mxu0 %v479
  %v1137 = vpop.f32.mrb[0].mxu0
  %v1138 = vadd.f32 %v148, %v1137
  %v1139 = vpop.f32.mrb[0].mxu0
  %1140 = vmatprep.mubr.f32.mxu0 0.0
  %1141 = vmatmul.mubr.f32.gmra.mrb[0].mxu0 %v482
  %v1142 = vpop.f32.mrb[0].mxu0
  %v1143 = vadd.f32 %v148, %v1142
  %v1144 = vpop.f32.mrb[0].mxu0
  %1145 = vmatprep.mubr.f32.mxu0 0.0
  %1146 = vmatmul.mubr.f32.gmra.mrb[0].mxu0 %v485
  %v1147 = vpop.f32.mrb[0].mxu0
  %v1148 = vadd.f32 %v148, %v1147
  %v1149 = vpop.f32.mrb[0].mxu0
  %1150 = vmatprep.mubr.f32.mxu0 0.0
  %1151 = vmatmul.mubr.f32.gmra.mrb[0].mxu0 %v488
  %v1152 = vpop.f32.mrb[0].mxu0
  %v1153 = vadd.f32 %v148, %v1152
  %v1154 = vpop.f32.mrb[0].mxu0
  %1155 = vmatprep.mubr.f32.mxu0 0.0
  %1156 = vmatmul.mubr.f32.gmra.mrb[0].mxu0 %v491
  %v1157 = vpop.f32.mrb[0].mxu0
  %v1158 = vadd.f32 %v148, %v1157
  %v1159 = vpop.f32.mrb[0].mxu0
  %1160 = vmatprep.mubr.f32.mxu0 0.0
  %1161 = vmatmul.mubr.f32.gmra.mrb[0].mxu0 %v494
  %v1162 = vpop.f32.mrb[0].mxu0
  %v1163 = vadd.f32 %v148, %v1162
  %v1164 = vpop.f32.mrb[0].mxu0
  %1165 = vmatprep.mubr.f32.mxu0 0.0
  %1166 = vmatmul.mubr.f32.gmra.mrb[0].mxu0 %v497
  %v1167 = vpop.f32.mrb[0].mxu0
  %v1168 = vadd.f32 %v148, %v1167
  %v1169 = vpop.f32.mrb[0].mxu0
  %1170 = vmatprep.mubr.f32.mxu0 0.0
  %1171 = vmatmul.mubr.f32.gmra.mrb[0].mxu0 %v500
  %v1172 = vpop.f32.mrb[0].mxu0
  %v1173 = vadd.f32 %v148, %v1172
  %v1174 = vpop.f32.mrb[0].mxu0
  %1175 = vmatprep.mubr.f32.mxu0 0.0
  %1176 = vmatmul.mubr.f32.gmra.mrb[0].mxu0 %v503
  %v1177 = vpop.f32.mrb[0].mxu0
  %v1178 = vadd.f32 %v148, %v1177
  %v1179 = vpop.f32.mrb[0].mxu0
  %1180 = vmatprep.mubr.f32.mxu0 0.0
  %1181 = vmatmul.mubr.f32.gmra.mrb[0].mxu0 %v506
  %v1182 = vpop.f32.mrb[0].mxu0
  %v1183 = vadd.f32 %v148, %v1182
  %v1184 = vpop.f32.mrb[0].mxu0
  %1185 = vmatprep.mubr.f32.mxu0 0.0
  %1186 = vmatmul.mubr.f32.gmra.mrb[0].mxu0 %v509
  %v1187 = vpop.f32.mrb[0].mxu0
  %v1188 = vadd.f32 %v148, %v1187
  %v1189 = vpop.f32.mrb[0].mxu0
  %1190 = vmatprep.mubr.f32.mxu0 0.0
  %1191 = vmatmul.mubr.f32.gmra.mrb[0].mxu0 %v512
  %v1192 = vpop.f32.mrb[0].mxu0
  %v1193 = vadd.f32 %v148, %v1192
  %v1194 = vpop.f32.mrb[0].mxu0
  %1195 = vmatprep.mubr.f32.mxu0 0.0
  %1196 = vmatmul.mubr.f32.gmra.mrb[0].mxu0 %v515
  %v1197 = vpop.f32.mrb[0].mxu0
  %v1198 = vadd.f32 %v148, %v1197
  %v1199 = vpop.f32.mrb[0].mxu0
  %1200 = vmatprep.mubr.f32.mxu0 0.0
  %1201 = vmatmul.mubr.f32.gmra.mrb[0].mxu0 %v518
  %v1202 = vpop.f32.mrb[0].mxu0
  %v1203 = vadd.f32 %v148, %v1202
  %v1204 = vpop.f32.mrb[0].mxu0
  %1205 = vmatprep.mubr.f32.mxu0 0.0
  %1206 = vmatmul.mubr.f32.gmra.mrb[0].mxu0 %v521
  %v1207 = vpop.f32.mrb[0].mxu0
  %v1208 = vadd.f32 %v148, %v1207
  %v1209 = vpop.f32.mrb[0].mxu0
  %1210 = vmatprep.mubr.f32.mxu0 0.0
  %1211 = vmatmul.mubr.f32.gmra.mrb[0].mxu0 %v524
  %v1212 = vpop.f32.mrb[0].mxu0
  %v1213 = vadd.f32 %v148, %v1212
  %v1214 = vpop.f32.mrb[0].mxu0
  %1215 = vdwg.mxu0
  %v1216 = vmax.f32 %v593, 0.0
  %v1217 = vmax.f32 %v598, 0.0
  %v1218 = vmax.f32 %v603, 0.0
  %v1219 = vmax.f32 %v608, 0.0
  %v1220 = vmax.f32 %v613, 0.0
  %v1221 = vmax.f32 %v618, 0.0
  %v1222 = vmax.f32 %v623, 0.0
  %v1223 = vmax.f32 %v628, 0.0
  %v1224 = vmax.f32 %v633, 0.0
  %v1225 = vmax.f32 %v638, 0.0
  %v1226 = vmax.f32 %v643, 0.0
  %v1227 = vmax.f32 %v648, 0.0
  %v1228 = vmax.f32 %v653, 0.0
  %v1229 = vmax.f32 %v658, 0.0
  %v1230 = vmax.f32 %v663, 0.0
  %v1231 = vmax.f32 %v668, 0.0
  %v1232 = vmax.f32 %v673, 0.0
  %v1233 = vmax.f32 %v678, 0.0
  %v1234 = vmax.f32 %v683, 0.0
  %v1235 = vmax.f32 %v688, 0.0
  %v1236 = vmax.f32 %v693, 0.0
  %v1237 = vmax.f32 %v698, 0.0
  %v1238 = vmax.f32 %v703, 0.0
  %v1239 = vmax.f32 %v708, 0.0
  %v1240 = vmax.f32 %v713, 0.0
  %v1241 = vmax.f32 %v718, 0.0
  %v1242 = vmax.f32 %v723, 0.0
  %v1243 = vmax.f32 %v728, 0.0
  %v1244 = vmax.f32 %v733, 0.0
  %v1245 = vmax.f32 %v738, 0.0
  %v1246 = vmax.f32 %v743, 0.0
  %v1247 = vmax.f32 %v748, 0.0
  %v1248 = vmax.f32 %v753, 0.0
  %v1249 = vmax.f32 %v758, 0.0
  %v1250 = vmax.f32 %v763, 0.0
  %v1251 = vmax.f32 %v768, 0.0
  %v1252 = vmax.f32 %v773, 0.0
  %v1253 = vmax.f32 %v778, 0.0
  %v1254 = vmax.f32 %v783, 0.0
  %v1255 = vmax.f32 %v788, 0.0
  %v1256 = vmax.f32 %v793, 0.0
  %v1257 = vmax.f32 %v798, 0.0
  %v1258 = vmax.f32 %v803, 0.0
  %v1259 = vmax.f32 %v808, 0.0
  %v1260 = vmax.f32 %v813, 0.0
  %v1261 = vmax.f32 %v818, 0.0
  %v1262 = vmax.f32 %v823, 0.0
  %v1263 = vmax.f32 %v828, 0.0
  %v1264 = vmax.f32 %v833, 0.0
  %v1265 = vmax.f32 %v838, 0.0
  %v1266 = vmax.f32 %v843, 0.0
  %v1267 = vmax.f32 %v848, 0.0
  %v1268 = vmax.f32 %v853, 0.0
  %v1269 = vmax.f32 %v858, 0.0
  %v1270 = vmax.f32 %v863, 0.0
  %v1271 = vmax.f32 %v868, 0.0
  %v1272 = vmax.f32 %v873, 0.0
  %v1273 = vmax.f32 %v878, 0.0
  %v1274 = vmax.f32 %v883, 0.0
  %v1275 = vmax.f32 %v888, 0.0
  %v1276 = vmax.f32 %v893, 0.0
  %v1277 = vmax.f32 %v898, 0.0
  %v1278 = vmax.f32 %v903, 0.0
  %v1279 = vmax.f32 %v908, 0.0
  %v1280 = vmax.f32 %v913, 0.0
  %v1281 = vmax.f32 %v918, 0.0
  %v1282 = vmax.f32 %v923, 0.0
  %v1283 = vmax.f32 %v928, 0.0
  %v1284 = vmax.f32 %v933, 0.0
  %v1285 = vmax.f32 %v938, 0.0
  %v1286 = vmax.f32 %v943, 0.0
  %v1287 = vmax.f32 %v948, 0.0
  %v1288 = vmax.f32 %v953, 0.0
  %v1289 = vmax.f32 %v958, 0.0
  %v1290 = vmax.f32 %v963, 0.0
  %v1291 = vmax.f32 %v968, 0.0
  %v1292 = vmax.f32 %v973, 0.0
  %v1293 = vmax.f32 %v978, 0.0
  %v1294 = vmax.f32 %v983, 0.0
  %v1295 = vmax.f32 %v988, 0.0
  %v1296 = vmax.f32 %v993, 0.0
  %v1297 = vmax.f32 %v998, 0.0
  %v1298 = vmax.f32 %v1003, 0.0
  %v1299 = vmax.f32 %v1008, 0.0
  %v1300 = vmax.f32 %v1013, 0.0
  %v1301 = vmax.f32 %v1018, 0.0
  %v1302 = vmax.f32 %v1023, 0.0
  %v1303 = vmax.f32 %v1028, 0.0
  %v1304 = vmax.f32 %v1033, 0.0
  %v1305 = vmax.f32 %v1038, 0.0
  %v1306 = vmax.f32 %v1043, 0.0
  %v1307 = vmax.f32 %v1048, 0.0
  %v1308 = vmax.f32 %v1053, 0.0
  %v1309 = vmax.f32 %v1058, 0.0
  %v1310 = vmax.f32 %v1063, 0.0
  %v1311 = vmax.f32 %v1068, 0.0
  %v1312 = vmax.f32 %v1073, 0.0
  %v1313 = vmax.f32 %v1078, 0.0
  %v1314 = vmax.f32 %v1083, 0.0
  %v1315 = vmax.f32 %v1088, 0.0
  %v1316 = vmax.f32 %v1093, 0.0
  %v1317 = vmax.f32 %v1098, 0.0
  %v1318 = vmax.f32 %v1103, 0.0
  %v1319 = vmax.f32 %v1108, 0.0
  %v1320 = vmax.f32 %v1113, 0.0
  %v1321 = vmax.f32 %v1118, 0.0
  %v1322 = vmax.f32 %v1123, 0.0
  %v1323 = vmax.f32 %v1128, 0.0
  %v1324 = vmax.f32 %v1133, 0.0
  %v1325 = vmax.f32 %v1138, 0.0
  %v1326 = vmax.f32 %v1143, 0.0
  %v1327 = vmax.f32 %v1148, 0.0
  %v1328 = vmax.f32 %v1153, 0.0
  %v1329 = vmax.f32 %v1158, 0.0
  %v1330 = vmax.f32 %v1163, 0.0
  %v1331 = vmax.f32 %v1168, 0.0
  %v1332 = vmax.f32 %v1173, 0.0
  %v1333 = vmax.f32 %v1178, 0.0
  %v1334 = vmax.f32 %v1183, 0.0
  %v1335 = vmax.f32 %v1188, 0.0
  %v1336 = vmax.f32 %v1193, 0.0
  %v1337 = vmax.f32 %v1198, 0.0
  %v1338 = vmax.f32 %v1203, 0.0
  %v1339 = vmax.f32 %v1208, 0.0
  %v1340 = vmax.f32 %v1213, 0.0
  %vm1341 = vcmask 392192
  %1342 = vst.msk [vmem:[%s3] sm:$0xff] %vm1341, %v1216
  %1343 = vst.msk [vmem:[%s3 + $0x8] sm:$0xff] %vm1341, %v1217
  %1344 = vst.msk [vmem:[%s3 + $0x10] sm:$0xff] %vm1341, %v1218
  %1345 = vst.msk [vmem:[%s3 + $0x18] sm:$0xff] %vm1341, %v1219
  %1346 = vst.msk [vmem:[%s3 + $0x20] sm:$0xff] %vm1341, %v1220
  %1347 = vst.msk [vmem:[%s3 + $0x28] sm:$0xff] %vm1341, %v1221
  %1348 = vst.msk [vmem:[%s3 + $0x30] sm:$0xff] %vm1341, %v1222
  %1349 = vst.msk [vmem:[%s3 + $0x38] sm:$0xff] %vm1341, %v1223
  %1350 = vst.msk [vmem:[%s3 + $0x40] sm:$0xff] %vm1341, %v1224
  %1351 = vst.msk [vmem:[%s3 + $0x48] sm:$0xff] %vm1341, %v1225
  %1352 = vst.msk [vmem:[%s3 + $0x50] sm:$0xff] %vm1341, %v1226
  %1353 = vst.msk [vmem:[%s3 + $0x58] sm:$0xff] %vm1341, %v1227
  %1354 = vst.msk [vmem:[%s3 + $0x60] sm:$0xff] %vm1341, %v1228
  %1355 = vst.msk [vmem:[%s3 + $0x68] sm:$0xff] %vm1341, %v1229
  %1356 = vst.msk [vmem:[%s3 + $0x70] sm:$0xff] %vm1341, %v1230
  %1357 = vst.msk [vmem:[%s3 + $0x78] sm:$0xff] %vm1341, %v1231
  %1358 = vst.msk [vmem:[%s3 + $0x80] sm:$0xff] %vm1341, %v1232
  %1359 = vst.msk [vmem:[%s3 + $0x88] sm:$0xff] %vm1341, %v1233
  %1360 = vst.msk [vmem:[%s3 + $0x90] sm:$0xff] %vm1341, %v1234
  %1361 = vst.msk [vmem:[%s3 + $0x98] sm:$0xff] %vm1341, %v1235
  %1362 = vst.msk [vmem:[%s3 + $0xa0] sm:$0xff] %vm1341, %v1236
  %1363 = vst.msk [vmem:[%s3 + $0xa8] sm:$0xff] %vm1341, %v1237
  %1364 = vst.msk [vmem:[%s3 + $0xb0] sm:$0xff] %vm1341, %v1238
  %1365 = vst.msk [vmem:[%s3 + $0xb8] sm:$0xff] %vm1341, %v1239
  %1366 = vst.msk [vmem:[%s3 + $0xc0] sm:$0xff] %vm1341, %v1240
  %1367 = vst.msk [vmem:[%s3 + $0xc8] sm:$0xff] %vm1341, %v1241
  %1368 = vst.msk [vmem:[%s3 + $0xd0] sm:$0xff] %vm1341, %v1242
  %1369 = vst.msk [vmem:[%s3 + $0xd8] sm:$0xff] %vm1341, %v1243
  %1370 = vst.msk [vmem:[%s3 + $0xe0] sm:$0xff] %vm1341, %v1244
  %1371 = vst.msk [vmem:[%s3 + $0xe8] sm:$0xff] %vm1341, %v1245
  %1372 = vst.msk [vmem:[%s3 + $0xf0] sm:$0xff] %vm1341, %v1246
  %1373 = vst.msk [vmem:[%s3 + $0xf8] sm:$0xff] %vm1341, %v1247
  %1374 = vst.msk [vmem:[%s3 + $0x100] sm:$0xff] %vm1341, %v1248
  %1375 = vst.msk [vmem:[%s3 + $0x108] sm:$0xff] %vm1341, %v1249
  %1376 = vst.msk [vmem:[%s3 + $0x110] sm:$0xff] %vm1341, %v1250
  %1377 = vst.msk [vmem:[%s3 + $0x118] sm:$0xff] %vm1341, %v1251
  %1378 = vst.msk [vmem:[%s3 + $0x120] sm:$0xff] %vm1341, %v1252
  %1379 = vst.msk [vmem:[%s3 + $0x128] sm:$0xff] %vm1341, %v1253
  %1380 = vst.msk [vmem:[%s3 + $0x130] sm:$0xff] %vm1341, %v1254
  %1381 = vst.msk [vmem:[%s3 + $0x138] sm:$0xff] %vm1341, %v1255
  %1382 = vst.msk [vmem:[%s3 + $0x140] sm:$0xff] %vm1341, %v1256
  %1383 = vst.msk [vmem:[%s3 + $0x148] sm:$0xff] %vm1341, %v1257
  %1384 = vst.msk [vmem:[%s3 + $0x150] sm:$0xff] %vm1341, %v1258
  %1385 = vst.msk [vmem:[%s3 + $0x158] sm:$0xff] %vm1341, %v1259
  %1386 = vst.msk [vmem:[%s3 + $0x160] sm:$0xff] %vm1341, %v1260
  %1387 = vst.msk [vmem:[%s3 + $0x168] sm:$0xff] %vm1341, %v1261
  %1388 = vst.msk [vmem:[%s3 + $0x170] sm:$0xff] %vm1341, %v1262
  %1389 = vst.msk [vmem:[%s3 + $0x178] sm:$0xff] %vm1341, %v1263
  %1390 = vst.msk [vmem:[%s3 + $0x180] sm:$0xff] %vm1341, %v1264
  %1391 = vst.msk [vmem:[%s3 + $0x188] sm:$0xff] %vm1341, %v1265
  %1392 = vst.msk [vmem:[%s3 + $0x190] sm:$0xff] %vm1341, %v1266
  %1393 = vst.msk [vmem:[%s3 + $0x198] sm:$0xff] %vm1341, %v1267
  %1394 = vst.msk [vmem:[%s3 + $0x1a0] sm:$0xff] %vm1341, %v1268
  %1395 = vst.msk [vmem:[%s3 + $0x1a8] sm:$0xff] %vm1341, %v1269
  %1396 = vst.msk [vmem:[%s3 + $0x1b0] sm:$0xff] %vm1341, %v1270
  %1397 = vst.msk [vmem:[%s3 + $0x1b8] sm:$0xff] %vm1341, %v1271
  %1398 = vst.msk [vmem:[%s3 + $0x1c0] sm:$0xff] %vm1341, %v1272
  %1399 = vst.msk [vmem:[%s3 + $0x1c8] sm:$0xff] %vm1341, %v1273
  %1400 = vst.msk [vmem:[%s3 + $0x1d0] sm:$0xff] %vm1341, %v1274
  %1401 = vst.msk [vmem:[%s3 + $0x1d8] sm:$0xff] %vm1341, %v1275
  %1402 = vst.msk [vmem:[%s3 + $0x1e0] sm:$0xff] %vm1341, %v1276
  %1403 = vst.msk [vmem:[%s3 + $0x1e8] sm:$0xff] %vm1341, %v1277
  %1404 = vst.msk [vmem:[%s3 + $0x1f0] sm:$0xff] %vm1341, %v1278
  %1405 = vst.msk [vmem:[%s3 + $0x1f8] sm:$0xff] %vm1341, %v1279
  %1406 = vst.msk [vmem:[%s3 + $0x200] sm:$0xff] %vm1341, %v1280
  %1407 = vst.msk [vmem:[%s3 + $0x208] sm:$0xff] %vm1341, %v1281
  %1408 = vst.msk [vmem:[%s3 + $0x210] sm:$0xff] %vm1341, %v1282
  %1409 = vst.msk [vmem:[%s3 + $0x218] sm:$0xff] %vm1341, %v1283
  %1410 = vst.msk [vmem:[%s3 + $0x220] sm:$0xff] %vm1341, %v1284
  %1411 = vst.msk [vmem:[%s3 + $0x228] sm:$0xff] %vm1341, %v1285
  %1412 = vst.msk [vmem:[%s3 + $0x230] sm:$0xff] %vm1341, %v1286
  %1413 = vst.msk [vmem:[%s3 + $0x238] sm:$0xff] %vm1341, %v1287
  %1414 = vst.msk [vmem:[%s3 + $0x240] sm:$0xff] %vm1341, %v1288
  %1415 = vst.msk [vmem:[%s3 + $0x248] sm:$0xff] %vm1341, %v1289
  %1416 = vst.msk [vmem:[%s3 + $0x250] sm:$0xff] %vm1341, %v1290
  %1417 = vst.msk [vmem:[%s3 + $0x258] sm:$0xff] %vm1341, %v1291
  %1418 = vst.msk [vmem:[%s3 + $0x260] sm:$0xff] %vm1341, %v1292
  %1419 = vst.msk [vmem:[%s3 + $0x268] sm:$0xff] %vm1341, %v1293
  %1420 = vst.msk [vmem:[%s3 + $0x270] sm:$0xff] %vm1341, %v1294
  %1421 = vst.msk [vmem:[%s3 + $0x278] sm:$0xff] %vm1341, %v1295
  %1422 = vst.msk [vmem:[%s3 + $0x280] sm:$0xff] %vm1341, %v1296
  %1423 = vst.msk [vmem:[%s3 + $0x288] sm:$0xff] %vm1341, %v1297
  %1424 = vst.msk [vmem:[%s3 + $0x290] sm:$0xff] %vm1341, %v1298
  %1425 = vst.msk [vmem:[%s3 + $0x298] sm:$0xff] %vm1341, %v1299
  %1426 = vst.msk [vmem:[%s3 + $0x2a0] sm:$0xff] %vm1341, %v1300
  %1427 = vst.msk [vmem:[%s3 + $0x2a8] sm:$0xff] %vm1341, %v1301
  %1428 = vst.msk [vmem:[%s3 + $0x2b0] sm:$0xff] %vm1341, %v1302
  %1429 = vst.msk [vmem:[%s3 + $0x2b8] sm:$0xff] %vm1341, %v1303
  %1430 = vst.msk [vmem:[%s3 + $0x2c0] sm:$0xff] %vm1341, %v1304
  %1431 = vst.msk [vmem:[%s3 + $0x2c8] sm:$0xff] %vm1341, %v1305
  %1432 = vst.msk [vmem:[%s3 + $0x2d0] sm:$0xff] %vm1341, %v1306
  %1433 = vst.msk [vmem:[%s3 + $0x2d8] sm:$0xff] %vm1341, %v1307
  %1434 = vst.msk [vmem:[%s3 + $0x2e0] sm:$0xff] %vm1341, %v1308
  %1435 = vst.msk [vmem:[%s3 + $0x2e8] sm:$0xff] %vm1341, %v1309
  %1436 = vst.msk [vmem:[%s3 + $0x2f0] sm:$0xff] %vm1341, %v1310
  %1437 = vst.msk [vmem:[%s3 + $0x2f8] sm:$0xff] %vm1341, %v1311
  %1438 = vst.msk [vmem:[%s3 + $0x300] sm:$0xff] %vm1341, %v1312
  %1439 = vst.msk [vmem:[%s3 + $0x308] sm:$0xff] %vm1341, %v1313
  %1440 = vst.msk [vmem:[%s3 + $0x310] sm:$0xff] %vm1341, %v1314
  %1441 = vst.msk [vmem:[%s3 + $0x318] sm:$0xff] %vm1341, %v1315
  %1442 = vst.msk [vmem:[%s3 + $0x320] sm:$0xff] %vm1341, %v1316
  %1443 = vst.msk [vmem:[%s3 + $0x328] sm:$0xff] %vm1341, %v1317
  %1444 = vst.msk [vmem:[%s3 + $0x330] sm:$0xff] %vm1341, %v1318
  %1445 = vst.msk [vmem:[%s3 + $0x338] sm:$0xff] %vm1341, %v1319
  %1446 = vst.msk [vmem:[%s3 + $0x340] sm:$0xff] %vm1341, %v1320
  %1447 = vst.msk [vmem:[%s3 + $0x348] sm:$0xff] %vm1341, %v1321
  %1448 = vst.msk [vmem:[%s3 + $0x350] sm:$0xff] %vm1341, %v1322
  %1449 = vst.msk [vmem:[%s3 + $0x358] sm:$0xff] %vm1341, %v1323
  %1450 = vst.msk [vmem:[%s3 + $0x360] sm:$0xff] %vm1341, %v1324
  %1451 = vst.msk [vmem:[%s3 + $0x368] sm:$0xff] %vm1341, %v1325
  %1452 = vst.msk [vmem:[%s3 + $0x370] sm:$0xff] %vm1341, %v1326
  %1453 = vst.msk [vmem:[%s3 + $0x378] sm:$0xff] %vm1341, %v1327
  %1454 = vst.msk [vmem:[%s3 + $0x380] sm:$0xff] %vm1341, %v1328
  %1455 = vst.msk [vmem:[%s3 + $0x388] sm:$0xff] %vm1341, %v1329
  %1456 = vst.msk [vmem:[%s3 + $0x390] sm:$0xff] %vm1341, %v1330
  %1457 = vst.msk [vmem:[%s3 + $0x398] sm:$0xff] %vm1341, %v1331
  %1458 = vst.msk [vmem:[%s3 + $0x3a0] sm:$0xff] %vm1341, %v1332
  %1459 = vst.msk [vmem:[%s3 + $0x3a8] sm:$0xff] %vm1341, %v1333
  %1460 = vst.msk [vmem:[%s3 + $0x3b0] sm:$0xff] %vm1341, %v1334
  %1461 = vst.msk [vmem:[%s3 + $0x3b8] sm:$0xff] %vm1341, %v1335
  %1462 = vst.msk [vmem:[%s3 + $0x3c0] sm:$0xff] %vm1341, %v1336
  %1463 = vst.msk [vmem:[%s3 + $0x3c8] sm:$0xff] %vm1341, %v1337
  %1464 = vst.msk [vmem:[%s3 + $0x3d0] sm:$0xff] %vm1341, %v1338
  %1465 = vst.msk [vmem:[%s3 + $0x3d8] sm:$0xff] %vm1341, %v1339
  %1466 = vst.msk [vmem:[%s3 + $0x3e0] sm:$0xff] %vm1341, %v1340
  // Predicated region
  $region14: #{tpu_custom_call.1} parent=0 // pred_check
    _
  $region15: #{tpu_custom_call.1} parent=0 // pred_check_branch
    %1468 = sbr.rel (0) target = $region17
  $region16: #{tpu_custom_call.1} parent=0 // pred_region
    _
  $region17: #{tpu_custom_call.1} parent=0 // pred_fallthru
    _
  // Predicated region
  $region18: #{tpu_custom_call.1} parent=0 // pred_check
    _
  $region19: #{tpu_custom_call.1} parent=0 // pred_check_branch
    %1470 = sbr.rel (0) target = $region21
  $region20: #{tpu_custom_call.1} parent=0 // pred_region
    _
  $region21: #{tpu_custom_call.1} parent=0 // pred_fallthru
    _

// kernel: tpu_custom_call.1
$region0: #{tpu_custom_call.1}
  #allocation0 [shape = 'u32[]', space=smem, size = 0x4, offset = 0x4, fixed_abs, tag = 'smem constant byte address 0x4 - core index']
  #allocation1 [shape = 'u32[144,128]{1,0:T(1,128)}', space=vmem, size = 0x12000, scoped, tag = 'internal scratch']
  %s0 = inlined_call_operand.vmem [shape: f32[1000,32], index: 0, kind: input, shape index: {}]
  %s1 = inlined_call_operand.vmem [shape: f32[32,48], index: 1, kind: input, shape index: {}]
  %s2 = inlined_call_operand.vmem [shape: f32[1,48], index: 2, kind: input, shape index: {}]
  %s3 = inlined_call_operand.vmem [shape: f32[1000,48], index: 3, kind: output, shape index: {}]
  %s4 = sld [smem:[#allocation0]]
  $region22: #{tpu_custom_call.1} parent=0
    _
  %s6 = ssub.s32 1, %s4
  %s7 = scalar_select 0, %s6, %s4
  // Predicated region
  $region2: #{tpu_custom_call.1} parent=0 // pred_check
    _
  $region3: #{tpu_custom_call.1} parent=0 // pred_check_branch
    %9 = sbr.rel (0) target = $region5
  $region4: #{tpu_custom_call.1} parent=0 // pred_region
    _
  $region5: #{tpu_custom_call.1} parent=0 // pred_fallthru
    _
  // Predicated region
  $region6: #{tpu_custom_call.1} parent=0 // pred_check
    _
  $region7: #{tpu_custom_call.1} parent=0 // pred_check_branch
    %11 = sbr.rel (0) target = $region9
  $region8: #{tpu_custom_call.1} parent=0 // pred_region
    _
  $region9: #{tpu_custom_call.1} parent=0 // pred_fallthru
    _
  // Predicated region
  $region10: #{tpu_custom_call.1} parent=0 // pred_check
    _
  $region11: #{tpu_custom_call.1} parent=0 // pred_check_branch
    %13 = sbr.rel (0) target = $region13
  $region12: #{tpu_custom_call.1} parent=0 // pred_region
    _
  $region13: #{tpu_custom_call.1} parent=0 // pred_fallthru
    _
  %v14 = vld [vmem:[%s0] sm:$0xff]
  %v15 = vld [vmem:[%s0 + $0x8] sm:$0xff]
  %v16 = vld [vmem:[%s0 + $0x10] sm:$0xff]
  %v17 = vld [vmem:[%s0 + $0x18] sm:$0xff]
  %v18 = vld [vmem:[%s0 + $0x20] sm:$0xff]
  %v19 = vld [vmem:[%s0 + $0x28] sm:$0xff]
  %v20 = vld [vmem:[%s0 + $0x30] sm:$0xff]
  %v21 = vld [vmem:[%s0 + $0x38] sm:$0xff]
  %v22 = vld [vmem:[%s0 + $0x40] sm:$0xff]
  %v23 = vld [vmem:[%s0 + $0x48] sm:$0xff]
  %v24 = vld [vmem:[%s0 + $0x50] sm:$0xff]
  %v25 = vld [vmem:[%s0 + $0x58] sm:$0xff]
  %v26 = vld [vmem:[%s0 + $0x60] sm:$0xff]
  %v27 = vld [vmem:[%s0 + $0x68] sm:$0xff]
  %v28 = vld [vmem:[%s0 + $0x70] sm:$0xff]
  %v29 = vld [vmem:[%s0 + $0x78] sm:$0xff]
  %v30 = vld [vmem:[%s0 + $0x80] sm:$0xff]
  %v31 = vld [vmem:[%s0 + $0x88] sm:$0xff]
  %v32 = vld [vmem:[%s0 + $0x90] sm:$0xff]
  %v33 = vld [vmem:[%s0 + $0x98] sm:$0xff]
  %v34 = vld [vmem:[%s0 + $0xa0] sm:$0xff]
  %v35 = vld [vmem:[%s0 + $0xa8] sm:$0xff]
  %v36 = vld [vmem:[%s0 + $0xb0] sm:$0xff]
  %v37 = vld [vmem:[%s0 + $0xb8] sm:$0xff]
  %v38 = vld [vmem:[%s0 + $0xc0] sm:$0xff]
  %v39 = vld [vmem:[%s0 + $0xc8] sm:$0xff]
  %v40 = vld [vmem:[%s0 + $0xd0] sm:$0xff]
  %v41 = vld [vmem:[%s0 + $0xd8] sm:$0xff]
  %v42 = vld [vmem:[%s0 + $0xe0] sm:$0xff]
  %v43 = vld [vmem:[%s0 + $0xe8] sm:$0xff]
  %v44 = vld [vmem:[%s0 + $0xf0] sm:$0xff]
  %v45 = vld [vmem:[%s0 + $0xf8] sm:$0xff]
  %v46 = vld [vmem:[%s0 + $0x100] sm:$0xff]
  %v47 = vld [vmem:[%s0 + $0x108] sm:$0xff]
  %v48 = vld [vmem:[%s0 + $0x110] sm:$0xff]
  %v49 = vld [vmem:[%s0 + $0x118] sm:$0xff]
  %v50 = vld [vmem:[%s0 + $0x120] sm:$0xff]
  %v51 = vld [vmem:[%s0 + $0x128] sm:$0xff]
  %v52 = vld [vmem:[%s0 + $0x130] sm:$0xff]
  %v53 = vld [vmem:[%s0 + $0x138] sm:$0xff]
  %v54 = vld [vmem:[%s0 + $0x140] sm:$0xff]
  %v55 = vld [vmem:[%s0 + $0x148] sm:$0xff]
  %v56 = vld [vmem:[%s0 + $0x150] sm:$0xff]
  %v57 = vld [vmem:[%s0 + $0x158] sm:$0xff]
  %v58 = vld [vmem:[%s0 + $0x160] sm:$0xff]
  %v59 = vld [vmem:[%s0 + $0x168] sm:$0xff]
  %v60 = vld [vmem:[%s0 + $0x170] sm:$0xff]
  %v61 = vld [vmem:[%s0 + $0x178] sm:$0xff]
  %v62 = vld [vmem:[%s0 + $0x180] sm:$0xff]
  %v63 = vld [vmem:[%s0 + $0x188] sm:$0xff]
  %v64 = vld [vmem:[%s0 + $0x190] sm:$0xff]
  %v65 = vld [vmem:[%s0 + $0x198] sm:$0xff]
  %v66 = vld [vmem:[%s0 + $0x1a0] sm:$0xff]
  %v67 = vld [vmem:[%s0 + $0x1a8] sm:$0xff]
  %v68 = vld [vmem:[%s0 + $0x1b0] sm:$0xff]
  %v69 = vld [vmem:[%s0 + $0x1b8] sm:$0xff]
  %v70 = vld [vmem:[%s0 + $0x1c0] sm:$0xff]
  %v71 = vld [vmem:[%s0 + $0x1c8] sm:$0xff]
  %v72 = vld [vmem:[%s0 + $0x1d0] sm:$0xff]
  %v73 = vld [vmem:[%s0 + $0x1d8] sm:$0xff]
  %v74 = vld [vmem:[%s0 + $0x1e0] sm:$0xff]
  %v75 = vld [vmem:[%s0 + $0x1e8] sm:$0xff]
  %v76 = vld [vmem:[%s0 + $0x1f0] sm:$0xff]
  %v77 = vld [vmem:[%s0 + $0x1f8] sm:$0xff]
  %v78 = vld [vmem:[%s0 + $0x200] sm:$0xff]
  %v79 = vld [vmem:[%s0 + $0x208] sm:$0xff]
  %v80 = vld [vmem:[%s0 + $0x210] sm:$0xff]
  %v81 = vld [vmem:[%s0 + $0x218] sm:$0xff]
  %v82 = vld [vmem:[%s0 + $0x220] sm:$0xff]
  %v83 = vld [vmem:[%s0 + $0x228] sm:$0xff]
  %v84 = vld [vmem:[%s0 + $0x230] sm:$0xff]
  %v85 = vld [vmem:[%s0 + $0x238] sm:$0xff]
  %v86 = vld [vmem:[%s0 + $0x240] sm:$0xff]
  %v87 = vld [vmem:[%s0 + $0x248] sm:$0xff]
  %v88 = vld [vmem:[%s0 + $0x250] sm:$0xff]
  %v89 = vld [vmem:[%s0 + $0x258] sm:$0xff]
  %v90 = vld [vmem:[%s0 + $0x260] sm:$0xff]
  %v91 = vld [vmem:[%s0 + $0x268] sm:$0xff]
  %v92 = vld [vmem:[%s0 + $0x270] sm:$0xff]
  %v93 = vld [vmem:[%s0 + $0x278] sm:$0xff]
  %v94 = vld [vmem:[%s0 + $0x280] sm:$0xff]
  %v95 = vld [vmem:[%s0 + $0x288] sm:$0xff]
  %v96 = vld [vmem:[%s0 + $0x290] sm:$0xff]
  %v97 = vld [vmem:[%s0 + $0x298] sm:$0xff]
  %v98 = vld [vmem:[%s0 + $0x2a0] sm:$0xff]
  %v99 = vld [vmem:[%s0 + $0x2a8] sm:$0xff]
  %v100 = vld [vmem:[%s0 + $0x2b0] sm:$0xff]
  %v101 = vld [vmem:[%s0 + $0x2b8] sm:$0xff]
  %v102 = vld [vmem:[%s0 + $0x2c0] sm:$0xff]
  %v103 = vld [vmem:[%s0 + $0x2c8] sm:$0xff]
  %v104 = vld [vmem:[%s0 + $0x2d0] sm:$0xff]
  %v105 = vld [vmem:[%s0 + $0x2d8] sm:$0xff]
  %v106 = vld [vmem:[%s0 + $0x2e0] sm:$0xff]
  %v107 = vld [vmem:[%s0 + $0x2e8] sm:$0xff]
  %v108 = vld [vmem:[%s0 + $0x2f0] sm:$0xff]
  %v109 = vld [vmem:[%s0 + $0x2f8] sm:$0xff]
  %v110 = vld [vmem:[%s0 + $0x300] sm:$0xff]
  %v111 = vld [vmem:[%s0 + $0x308] sm:$0xff]
  %v112 = vld [vmem:[%s0 + $0x310] sm:$0xff]
  %v113 = vld [vmem:[%s0 + $0x318] sm:$0xff]
  %v114 = vld [vmem:[%s0 + $0x320] sm:$0xff]
  %v115 = vld [vmem:[%s0 + $0x328] sm:$0xff]
  %v116 = vld [vmem:[%s0 + $0x330] sm:$0xff]
  %v117 = vld [vmem:[%s0 + $0x338] sm:$0xff]
  %v118 = vld [vmem:[%s0 + $0x340] sm:$0xff]
  %v119 = vld [vmem:[%s0 + $0x348] sm:$0xff]
  %v120 = vld [vmem:[%s0 + $0x350] sm:$0xff]
  %v121 = vld [vmem:[%s0 + $0x358] sm:$0xff]
  %v122 = vld [vmem:[%s0 + $0x360] sm:$0xff]
  %v123 = vld [vmem:[%s0 + $0x368] sm:$0xff]
  %v124 = vld [vmem:[%s0 + $0x370] sm:$0xff]
  %v125 = vld [vmem:[%s0 + $0x378] sm:$0xff]
  %v126 = vld [vmem:[%s0 + $0x380] sm:$0xff]
  %v127 = vld [vmem:[%s0 + $0x388] sm:$0xff]
  %v128 = vld [vmem:[%s0 + $0x390] sm:$0xff]
  %v129 = vld [vmem:[%s0 + $0x398] sm:$0xff]
  %v130 = vld [vmem:[%s0 + $0x3a0] sm:$0xff]
  %v131 = vld [vmem:[%s0 + $0x3a8] sm:$0xff]
  %v132 = vld [vmem:[%s0 + $0x3b0] sm:$0xff]
  %v133 = vld [vmem:[%s0 + $0x3b8] sm:$0xff]
  %v134 = vld [vmem:[%s0 + $0x3c0] sm:$0xff]
  %v135 = vld [vmem:[%s0 + $0x3c8] sm:$0xff]
  %v136 = vld [vmem:[%s0 + $0x3d0] sm:$0xff]
  %v137 = vld [vmem:[%s0 + $0x3d8] sm:$0xff]
  %v138 = vld [vmem:[%s0 + $0x3e0] sm:$0xff]
  %v139 = vld [vmem:[%s1] sm:$0xff]
  %v140 = vld [vmem:[%s1 + $0x8] sm:$0xff]
  %v141 = vld [vmem:[%s1 + $0x10] sm:$0xff]
  %v142 = vld [vmem:[%s1 + $0x18] sm:$0xff]
  %v143 = vld [vmem:[%s2] sm:$0x1]
  %v145 = vlaneseq
  %v146 = vshrl.u32 %v145, 7
  %v147 = vsub.s32 0, %v146
  %v148 = vrot.slane %v143, %v147
  %vm150 = vcmask 261120
  %v152 = vsel %vm150, %v14, 0
  %v155 = vsel %vm150, %v15, 0
  %v158 = vsel %vm150, %v16, 0
  %v161 = vsel %vm150, %v17, 0
  %v164 = vsel %vm150, %v18, 0
  %v167 = vsel %vm150, %v19, 0
  %v170 = vsel %vm150, %v20, 0
  %v173 = vsel %vm150, %v21, 0
  %v176 = vsel %vm150, %v22, 0
  %v179 = vsel %vm150, %v23, 0
  %v182 = vsel %vm150, %v24, 0
  %v185 = vsel %vm150, %v25, 0
  %v188 = vsel %vm150, %v26, 0
  %v191 = vsel %vm150, %v27, 0
  %v194 = vsel %vm150, %v28, 0
  %v197 = vsel %vm150, %v29, 0
  %v200 = vsel %vm150, %v30, 0
  %v203 = vsel %vm150, %v31, 0
  %v206 = vsel %vm150, %v32, 0
  %v209 = vsel %vm150, %v33, 0
  %v212 = vsel %vm150, %v34, 0
  %v215 = vsel %vm150, %v35, 0
  %v218 = vsel %vm150, %v36, 0
  %v221 = vsel %vm150, %v37, 0
  %v224 = vsel %vm150, %v38, 0
  %v227 = vsel %vm150, %v39, 0
  %v230 = vsel %vm150, %v40, 0
  %v233 = vsel %vm150, %v41, 0
  %v236 = vsel %vm150, %v42, 0
  %v239 = vsel %vm150, %v43, 0
  %v242 = vsel %vm150, %v44, 0
  %v245 = vsel %vm150, %v45, 0
  %v248 = vsel %vm150, %v46, 0
  %v251 = vsel %vm150, %v47, 0
  %v254 = vsel %vm150, %v48, 0
  %v257 = vsel %vm150, %v49, 0
  %v260 = vsel %vm150, %v50, 0
  %v263 = vsel %vm150, %v51, 0
  %v266 = vsel %vm150, %v52, 0
  %v269 = vsel %vm150, %v53, 0
  %v272 = vsel %vm150, %v54, 0
  %v275 = vsel %vm150, %v55, 0
  %v278 = vsel %vm150, %v56, 0
  %v281 = vsel %vm150, %v57, 0
  %v284 = vsel %vm150, %v58, 0
  %v287 = vsel %vm150, %v59, 0
  %v290 = vsel %vm150, %v60, 0
  %v293 = vsel %vm150, %v61, 0
  %v296 = vsel %vm150, %v62, 0
  %v299 = vsel %vm150, %v63, 0
  %v302 = vsel %vm150, %v64, 0
  %v305 = vsel %vm150, %v65, 0
  %v308 = vsel %vm150, %v66, 0
  %v311 = vsel %vm150, %v67, 0
  %v314 = vsel %vm150, %v68, 0
  %v317 = vsel %vm150, %v69, 0
  %v320 = vsel %vm150, %v70, 0
  %v323 = vsel %vm150, %v71, 0
  %v326 = vsel %vm150, %v72, 0
  %v329 = vsel %vm150, %v73, 0
  %v332 = vsel %vm150, %v74, 0
  %v335 = vsel %vm150, %v75, 0
  %v338 = vsel %vm150, %v76, 0
  %v341 = vsel %vm150, %v77, 0
  %v344 = vsel %vm150, %v78, 0
  %v347 = vsel %vm150, %v79, 0
  %v350 = vsel %vm150, %v80, 0
  %v353 = vsel %vm150, %v81, 0
  %v356 = vsel %vm150, %v82, 0
  %v359 = vsel %vm150, %v83, 0
  %v362 = vsel %vm150, %v84, 0
  %v365 = vsel %vm150, %v85, 0
  %v368 = vsel %vm150, %v86, 0
  %v371 = vsel %vm150, %v87, 0
  %v374 = vsel %vm150, %v88, 0
  %v377 = vsel %vm150, %v89, 0
  %v380 = vsel %vm150, %v90, 0
  %v383 = vsel %vm150, %v91, 0
  %v386 = vsel %vm150, %v92, 0
  %v389 = vsel %vm150, %v93, 0
  %v392 = vsel %vm150, %v94, 0
  %v395 = vsel %vm150, %v95, 0
  %v398 = vsel %vm150, %v96, 0
  %v401 = vsel %vm150, %v97, 0
  %v404 = vsel %vm150, %v98, 0
  %v407 = vsel %vm150, %v99, 0
  %v410 = vsel %vm150, %v100, 0
  %v413 = vsel %vm150, %v101, 0
  %v416 = vsel %vm150, %v102, 0
  %v419 = vsel %vm150, %v103, 0
  %v422 = vsel %vm150, %v104, 0
  %v425 = vsel %vm150, %v105, 0
  %v428 = vsel %vm150, %v106, 0
  %v431 = vsel %vm150, %v107, 0
  %v434 = vsel %vm150, %v108, 0
  %v437 = vsel %vm150, %v109, 0
  %v440 = vsel %vm150, %v110, 0
  %v443 = vsel %vm150, %v111, 0
  %v446 = vsel %vm150, %v112, 0
  %v449 = vsel %vm150, %v113, 0
  %v452 = vsel %vm150, %v114, 0
  %v455 = vsel %vm150, %v115, 0
  %v458 = vsel %vm150, %v116, 0
  %v461 = vsel %vm150, %v117, 0
  %v464 = vsel %vm150, %v118, 0
  %v467 = vsel %vm150, %v119, 0
  %v470 = vsel %vm150, %v120, 0
  %v473 = vsel %vm150, %v121, 0
  %v476 = vsel %vm150, %v122, 0
  %v479 = vsel %vm150, %v123, 0
  %v482 = vsel %vm150, %v124, 0
  %v485 = vsel %vm150, %v125, 0
  %v488 = vsel %vm150, %v126, 0
  %v491 = vsel %vm150, %v127, 0
  %v494 = vsel %vm150, %v128, 0
  %v497 = vsel %vm150, %v129, 0
  %v500 = vsel %vm150, %v130, 0
  %v503 = vsel %vm150, %v131, 0
  %v506 = vsel %vm150, %v132, 0
  %v509 = vsel %vm150, %v133, 0
  %v512 = vsel %vm150, %v134, 0
  %v515 = vsel %vm150, %v135, 0
  %v518 = vsel %vm150, %v136, 0
  %v521 = vsel %vm150, %v137, 0
  %v524 = vsel %vm150, %v138, 0
  %526 = vmatprep.subr.mxu0 0.0
  %527 = vmatpush1.msra.mxu0 %v139
  %528 = vmatprep.subr.mxu0 0.0
  %529 = vmatpush1.msra.mxu0 %v140
  %530 = vmatprep.subr.mxu0 0.0
  %531 = vmatpush1.msra.mxu0 %v141
  %532 = vmatprep.subr.mxu0 0.0
  %533 = vmatpush1.msra.mxu0 %v142
  %534 = vmatprep.subr.mxu0 0.0
  %535 = vmatpush1.msra.mxu0 0.0
  %536 = vmatprep.subr.mxu0 0.0
  %537 = vmatpush1.msra.mxu0 0.0
  %538 = vmatprep.subr.mxu0 0.0
  %539 = vmatpush1.msra.mxu0 0.0
  %540 = vmatprep.subr.mxu0 0.0
  %541 = vmatpush1.msra.mxu0 0.0
  %542 = vmatprep.subr.mxu0 0.0
  %543 = vmatpush1.msra.mxu0 0.0
  %544 = vmatprep.subr.mxu0 0.0
  %545 = vmatpush1.msra.mxu0 0.0
  %546 = vmatprep.subr.mxu0 0.0
  %547 = vmatpush1.msra.mxu0 0.0
  %548 = vmatprep.subr.mxu0 0.0
  %549 = vmatpush1.msra.mxu0 0.0
  %550 = vmatprep.subr.mxu0 0.0
  %551 = vmatpush1.msra.mxu0 0.0
  %552 = vmatprep.subr.mxu0 0.0
  %553 = vmatpush1.msra.mxu0 0.0
  %554 = vmatprep.subr.mxu0 0.0
  %555 = vmatpush1.msra.mxu0 0.0
  %556 = vmatprep.subr.mxu0 0.0
  %557 = vmatpush1.msra.mxu0 0.0
  %558 = vmatprep.subr.mxu0 0.0
  %559 = vmatpush1.msra.mxu0 0.0
  %560 = vmatprep.subr.mxu0 0.0
  %561 = vmatpush1.msra.mxu0 0.0
  %562 = vmatprep.subr.mxu0 0.0
  %563 = vmatpush1.msra.mxu0 0.0
  %564 = vmatprep.subr.mxu0 0.0
  %565 = vmatpush1.msra.mxu0 0.0
  %566 = vmatprep.subr.mxu0 0.0
  %567 = vmatpush1.msra.mxu0 0.0
  %568 = vmatprep.subr.mxu0 0.0
  %569 = vmatpush1.msra.mxu0 0.0
  %570 = vmatprep.subr.mxu0 0.0
  %571 = vmatpush1.msra.mxu0 0.0
  %572 = vmatprep.subr.mxu0 0.0
  %573 = vmatpush1.msra.mxu0 0.0
  %574 = vmatprep.subr.mxu0 0.0
  %575 = vmatpush1.msra.mxu0 0.0
  %576 = vmatprep.subr.mxu0 0.0
  %577 = vmatpush1.msra.mxu0 0.0
  %578 = vmatprep.subr.mxu0 0.0
  %579 = vmatpush1.msra.mxu0 0.0
  %580 = vmatprep.subr.mxu0 0.0
  %581 = vmatpush1.msra.mxu0 0.0
  %582 = vmatprep.subr.mxu0 0.0
  %583 = vmatpush1.msra.mxu0 0.0
  %584 = vmatprep.subr.mxu0 0.0
  %585 = vmatpush1.msra.mxu0 0.0
  %586 = vmatprep.subr.mxu0 0.0
  %587 = vmatpush1.msra.mxu0 0.0
  %588 = vmatprep.subr.mxu0 0.0
  %589 = vmatpush1.msra.mxu0 0.0
  %590 = vmatprep.mubr.f32.mxu0 0.0
  %591 = vmatmul.mubr.f32.gmra.mrb[0].mxu0 %v152
  %v592 = vpop.f32.mrb[0].mxu0
  %v593 = vadd.f32 %v148, %v592
  %v594 = vpop.f32.mrb[0].mxu0
  %595 = vmatprep.mubr.f32.mxu0 0.0
  %596 = vmatmul.mubr.f32.gmra.mrb[0].mxu0 %v155
  %v597 = vpop.f32.mrb[0].mxu0
  %v598 = vadd.f32 %v148, %v597
  %v599 = vpop.f32.mrb[0].mxu0
  %600 = vmatprep.mubr.f32.mxu0 0.0
  %601 = vmatmul.mubr.f32.gmra.mrb[0].mxu0 %v158
  %v602 = vpop.f32.mrb[0].mxu0
  %v603 = vadd.f32 %v148, %v602
  %v604 = vpop.f32.mrb[0].mxu0
  %605 = vmatprep.mubr.f32.mxu0 0.0
  %606 = vmatmul.mubr.f32.gmra.mrb[0].mxu0 %v161
  %v607 = vpop.f32.mrb[0].mxu0
  %v608 = vadd.f32 %v148, %v607
  %v609 = vpop.f32.mrb[0].mxu0
  %610 = vmatprep.mubr.f32.mxu0 0.0
  %611 = vmatmul.mubr.f32.gmra.mrb[0].mxu0 %v164
  %v612 = vpop.f32.mrb[0].mxu0
  %v613 = vadd.f32 %v148, %v612
  %v614 = vpop.f32.mrb[0].mxu0
  %615 = vmatprep.mubr.f32.mxu0 0.0
  %616 = vmatmul.mubr.f32.gmra.mrb[0].mxu0 %v167
  %v617 = vpop.f32.mrb[0].mxu0
  %v618 = vadd.f32 %v148, %v617
  %v619 = vpop.f32.mrb[0].mxu0
  %620 = vmatprep.mubr.f32.mxu0 0.0
  %621 = vmatmul.mubr.f32.gmra.mrb[0].mxu0 %v170
  %v622 = vpop.f32.mrb[0].mxu0
  %v623 = vadd.f32 %v148, %v622
  %v624 = vpop.f32.mrb[0].mxu0
  %625 = vmatprep.mubr.f32.mxu0 0.0
  %626 = vmatmul.mubr.f32.gmra.mrb[0].mxu0 %v173
  %v627 = vpop.f32.mrb[0].mxu0
  %v628 = vadd.f32 %v148, %v627
  %v629 = vpop.f32.mrb[0].mxu0
  %630 = vmatprep.mubr.f32.mxu0 0.0
  %631 = vmatmul.mubr.f32.gmra.mrb[0].mxu0 %v176
  %v632 = vpop.f32.mrb[0].mxu0
  %v633 = vadd.f32 %v148, %v632
  %v634 = vpop.f32.mrb[0].mxu0
  %635 = vmatprep.mubr.f32.mxu0 0.0
  %636 = vmatmul.mubr.f32.gmra.mrb[0].mxu0 %v179
  %v637 = vpop.f32.mrb[0].mxu0
  %v638 = vadd.f32 %v148, %v637
  %v639 = vpop.f32.mrb[0].mxu0
  %640 = vmatprep.mubr.f32.mxu0 0.0
  %641 = vmatmul.mubr.f32.gmra.mrb[0].mxu0 %v182
  %v642 = vpop.f32.mrb[0].mxu0
  %v643 = vadd.f32 %v148, %v642
  %v644 = vpop.f32.mrb[0].mxu0
  %645 = vmatprep.mubr.f32.mxu0 0.0
  %646 = vmatmul.mubr.f32.gmra.mrb[0].mxu0 %v185
  %v647 = vpop.f32.mrb[0].mxu0
  %v648 = vadd.f32 %v148, %v647
  %v649 = vpop.f32.mrb[0].mxu0
  %650 = vmatprep.mubr.f32.mxu0 0.0
  %651 = vmatmul.mubr.f32.gmra.mrb[0].mxu0 %v188
  %v652 = vpop.f32.mrb[0].mxu0
  %v653 = vadd.f32 %v148, %v652
  %v654 = vpop.f32.mrb[0].mxu0
  %655 = vmatprep.mubr.f32.mxu0 0.0
  %656 = vmatmul.mubr.f32.gmra.mrb[0].mxu0 %v191
  %v657 = vpop.f32.mrb[0].mxu0
  %v658 = vadd.f32 %v148, %v657
  %v659 = vpop.f32.mrb[0].mxu0
  %660 = vmatprep.mubr.f32.mxu0 0.0
  %661 = vmatmul.mubr.f32.gmra.mrb[0].mxu0 %v194
  %v662 = vpop.f32.mrb[0].mxu0
  %v663 = vadd.f32 %v148, %v662
  %v664 = vpop.f32.mrb[0].mxu0
  %665 = vmatprep.mubr.f32.mxu0 0.0
  %666 = vmatmul.mubr.f32.gmra.mrb[0].mxu0 %v197
  %v667 = vpop.f32.mrb[0].mxu0
  %v668 = vadd.f32 %v148, %v667
  %v669 = vpop.f32.mrb[0].mxu0
  %670 = vmatprep.mubr.f32.mxu0 0.0
  %671 = vmatmul.mubr.f32.gmra.mrb[0].mxu0 %v200
  %v672 = vpop.f32.mrb[0].mxu0
  %v673 = vadd.f32 %v148, %v672
  %v674 = vpop.f32.mrb[0].mxu0
  %675 = vmatprep.mubr.f32.mxu0 0.0
  %676 = vmatmul.mubr.f32.gmra.mrb[0].mxu0 %v203
  %v677 = vpop.f32.mrb[0].mxu0
  %v678 = vadd.f32 %v148, %v677
  %v679 = vpop.f32.mrb[0].mxu0
  %680 = vmatprep.mubr.f32.mxu0 0.0
  %681 = vmatmul.mubr.f32.gmra.mrb[0].mxu0 %v206
  %v682 = vpop.f32.mrb[0].mxu0
  %v683 = vadd.f32 %v148, %v682
  %v684 = vpop.f32.mrb[0].mxu0
  %685 = vmatprep.mubr.f32.mxu0 0.0
  %686 = vmatmul.mubr.f32.gmra.mrb[0].mxu0 %v209
  %v687 = vpop.f32.mrb[0].mxu0
  %v688 = vadd.f32 %v148, %v687
  %v689 = vpop.f32.mrb[0].mxu0
  %690 = vmatprep.mubr.f32.mxu0 0.0
  %691 = vmatmul.mubr.f32.gmra.mrb[0].mxu0 %v212
  %v692 = vpop.f32.mrb[0].mxu0
  %v693 = vadd.f32 %v148, %v692
  %v694 = vpop.f32.mrb[0].mxu0
  %695 = vmatprep.mubr.f32.mxu0 0.0
  %696 = vmatmul.mubr.f32.gmra.mrb[0].mxu0 %v215
  %v697 = vpop.f32.mrb[0].mxu0
  %v698 = vadd.f32 %v148, %v697
  %v699 = vpop.f32.mrb[0].mxu0
  %700 = vmatprep.mubr.f32.mxu0 0.0
  %701 = vmatmul.mubr.f32.gmra.mrb[0].mxu0 %v218
  %v702 = vpop.f32.mrb[0].mxu0
  %v703 = vadd.f32 %v148, %v702
  %v704 = vpop.f32.mrb[0].mxu0
  %705 = vmatprep.mubr.f32.mxu0 0.0
  %706 = vmatmul.mubr.f32.gmra.mrb[0].mxu0 %v221
  %v707 = vpop.f32.mrb[0].mxu0
  %v708 = vadd.f32 %v148, %v707
  %v709 = vpop.f32.mrb[0].mxu0
  %710 = vmatprep.mubr.f32.mxu0 0.0
  %711 = vmatmul.mubr.f32.gmra.mrb[0].mxu0 %v224
  %v712 = vpop.f32.mrb[0].mxu0
  %v713 = vadd.f32 %v148, %v712
  %v714 = vpop.f32.mrb[0].mxu0
  %715 = vmatprep.mubr.f32.mxu0 0.0
  %716 = vmatmul.mubr.f32.gmra.mrb[0].mxu0 %v227
  %v717 = vpop.f32.mrb[0].mxu0
  %v718 = vadd.f32 %v148, %v717
  %v719 = vpop.f32.mrb[0].mxu0
  %720 = vmatprep.mubr.f32.mxu0 0.0
  %721 = vmatmul.mubr.f32.gmra.mrb[0].mxu0 %v230
  %v722 = vpop.f32.mrb[0].mxu0
  %v723 = vadd.f32 %v148, %v722
  %v724 = vpop.f32.mrb[0].mxu0
  %725 = vmatprep.mubr.f32.mxu0 0.0
  %726 = vmatmul.mubr.f32.gmra.mrb[0].mxu0 %v233
  %v727 = vpop.f32.mrb[0].mxu0
  %v728 = vadd.f32 %v148, %v727
  %v729 = vpop.f32.mrb[0].mxu0
  %730 = vmatprep.mubr.f32.mxu0 0.0
  %731 = vmatmul.mubr.f32.gmra.mrb[0].mxu0 %v236
  %v732 = vpop.f32.mrb[0].mxu0
  %v733 = vadd.f32 %v148, %v732
  %v734 = vpop.f32.mrb[0].mxu0
  %735 = vmatprep.mubr.f32.mxu0 0.0
  %736 = vmatmul.mubr.f32.gmra.mrb[0].mxu0 %v239
  %v737 = vpop.f32.mrb[0].mxu0
  %v738 = vadd.f32 %v148, %v737
  %v739 = vpop.f32.mrb[0].mxu0
  %740 = vmatprep.mubr.f32.mxu0 0.0
  %741 = vmatmul.mubr.f32.gmra.mrb[0].mxu0 %v242
  %v742 = vpop.f32.mrb[0].mxu0
  %v743 = vadd.f32 %v148, %v742
  %v744 = vpop.f32.mrb[0].mxu0
  %745 = vmatprep.mubr.f32.mxu0 0.0
  %746 = vmatmul.mubr.f32.gmra.mrb[0].mxu0 %v245
  %v747 = vpop.f32.mrb[0].mxu0
  %v748 = vadd.f32 %v148, %v747
  %v749 = vpop.f32.mrb[0].mxu0
  %750 = vmatprep.mubr.f32.mxu0 0.0
  %751 = vmatmul.mubr.f32.gmra.mrb[0].mxu0 %v248
  %v752 = vpop.f32.mrb[0].mxu0
  %v753 = vadd.f32 %v148, %v752
  %v754 = vpop.f32.mrb[0].mxu0
  %755 = vmatprep.mubr.f32.mxu0 0.0
  %756 = vmatmul.mubr.f32.gmra.mrb[0].mxu0 %v251
  %v757 = vpop.f32.mrb[0].mxu0
  %v758 = vadd.f32 %v148, %v757
  %v759 = vpop.f32.mrb[0].mxu0
  %760 = vmatprep.mubr.f32.mxu0 0.0
  %761 = vmatmul.mubr.f32.gmra.mrb[0].mxu0 %v254
  %v762 = vpop.f32.mrb[0].mxu0
  %v763 = vadd.f32 %v148, %v762
  %v764 = vpop.f32.mrb[0].mxu0
  %765 = vmatprep.mubr.f32.mxu0 0.0
  %766 = vmatmul.mubr.f32.gmra.mrb[0].mxu0 %v257
  %v767 = vpop.f32.mrb[0].mxu0
  %v768 = vadd.f32 %v148, %v767
  %v769 = vpop.f32.mrb[0].mxu0
  %770 = vmatprep.mubr.f32.mxu0 0.0
  %771 = vmatmul.mubr.f32.gmra.mrb[0].mxu0 %v260
  %v772 = vpop.f32.mrb[0].mxu0
  %v773 = vadd.f32 %v148, %v772
  %v774 = vpop.f32.mrb[0].mxu0
  %775 = vmatprep.mubr.f32.mxu0 0.0
  %776 = vmatmul.mubr.f32.gmra.mrb[0].mxu0 %v263
  %v777 = vpop.f32.mrb[0].mxu0
  %v778 = vadd.f32 %v148, %v777
  %v779 = vpop.f32.mrb[0].mxu0
  %780 = vmatprep.mubr.f32.mxu0 0.0
  %781 = vmatmul.mubr.f32.gmra.mrb[0].mxu0 %v266
  %v782 = vpop.f32.mrb[0].mxu0
  %v783 = vadd.f32 %v148, %v782
  %v784 = vpop.f32.mrb[0].mxu0
  %785 = vmatprep.mubr.f32.mxu0 0.0
  %786 = vmatmul.mubr.f32.gmra.mrb[0].mxu0 %v269
  %v787 = vpop.f32.mrb[0].mxu0
  %v788 = vadd.f32 %v148, %v787
  %v789 = vpop.f32.mrb[0].mxu0
  %790 = vmatprep.mubr.f32.mxu0 0.0
  %791 = vmatmul.mubr.f32.gmra.mrb[0].mxu0 %v272
  %v792 = vpop.f32.mrb[0].mxu0
  %v793 = vadd.f32 %v148, %v792
  %v794 = vpop.f32.mrb[0].mxu0
  %795 = vmatprep.mubr.f32.mxu0 0.0
  %796 = vmatmul.mubr.f32.gmra.mrb[0].mxu0 %v275
  %v797 = vpop.f32.mrb[0].mxu0
  %v798 = vadd.f32 %v148, %v797
  %v799 = vpop.f32.mrb[0].mxu0
  %800 = vmatprep.mubr.f32.mxu0 0.0
  %801 = vmatmul.mubr.f32.gmra.mrb[0].mxu0 %v278
  %v802 = vpop.f32.mrb[0].mxu0
  %v803 = vadd.f32 %v148, %v802
  %v804 = vpop.f32.mrb[0].mxu0
  %805 = vmatprep.mubr.f32.mxu0 0.0
  %806 = vmatmul.mubr.f32.gmra.mrb[0].mxu0 %v281
  %v807 = vpop.f32.mrb[0].mxu0
  %v808 = vadd.f32 %v148, %v807
  %v809 = vpop.f32.mrb[0].mxu0
  %810 = vmatprep.mubr.f32.mxu0 0.0
  %811 = vmatmul.mubr.f32.gmra.mrb[0].mxu0 %v284
  %v812 = vpop.f32.mrb[0].mxu0
  %v813 = vadd.f32 %v148, %v812
  %v814 = vpop.f32.mrb[0].mxu0
  %815 = vmatprep.mubr.f32.mxu0 0.0
  %816 = vmatmul.mubr.f32.gmra.mrb[0].mxu0 %v287
  %v817 = vpop.f32.mrb[0].mxu0
  %v818 = vadd.f32 %v148, %v817
  %v819 = vpop.f32.mrb[0].mxu0
  %820 = vmatprep.mubr.f32.mxu0 0.0
  %821 = vmatmul.mubr.f32.gmra.mrb[0].mxu0 %v290
  %v822 = vpop.f32.mrb[0].mxu0
  %v823 = vadd.f32 %v148, %v822
  %v824 = vpop.f32.mrb[0].mxu0
  %825 = vmatprep.mubr.f32.mxu0 0.0
  %826 = vmatmul.mubr.f32.gmra.mrb[0].mxu0 %v293
  %v827 = vpop.f32.mrb[0].mxu0
  %v828 = vadd.f32 %v148, %v827
  %v829 = vpop.f32.mrb[0].mxu0
  %830 = vmatprep.mubr.f32.mxu0 0.0
  %831 = vmatmul.mubr.f32.gmra.mrb[0].mxu0 %v296
  %v832 = vpop.f32.mrb[0].mxu0
  %v833 = vadd.f32 %v148, %v832
  %v834 = vpop.f32.mrb[0].mxu0
  %835 = vmatprep.mubr.f32.mxu0 0.0
  %836 = vmatmul.mubr.f32.gmra.mrb[0].mxu0 %v299
  %v837 = vpop.f32.mrb[0].mxu0
  %v838 = vadd.f32 %v148, %v837
  %v839 = vpop.f32.mrb[0].mxu0
  %840 = vmatprep.mubr.f32.mxu0 0.0
  %841 = vmatmul.mubr.f32.gmra.mrb[0].mxu0 %v302
  %v842 = vpop.f32.mrb[0].mxu0
  %v843 = vadd.f32 %v148, %v842
  %v844 = vpop.f32.mrb[0].mxu0
  %845 = vmatprep.mubr.f32.mxu0 0.0
  %846 = vmatmul.mubr.f32.gmra.mrb[0].mxu0 %v305
  %v847 = vpop.f32.mrb[0].mxu0
  %v848 = vadd.f32 %v148, %v847
  %v849 = vpop.f32.mrb[0].mxu0
  %850 = vmatprep.mubr.f32.mxu0 0.0
  %851 = vmatmul.mubr.f32.gmra.mrb[0].mxu0 %v308
  %v852 = vpop.f32.mrb[0].mxu0
  %v853 = vadd.f32 %v148, %v852
  %v854 = vpop.f32.mrb[0].mxu0
  %855 = vmatprep.mubr.f32.mxu0 0.0
  %856 = vmatmul.mubr.f32.gmra.mrb[0].mxu0 %v311
  %v857 = vpop.f32.mrb[0].mxu0
  %v858 = vadd.f32 %v148, %v857
  %v859 = vpop.f32.mrb[0].mxu0
  %860 = vmatprep.mubr.f32.mxu0 0.0
  %861 = vmatmul.mubr.f32.gmra.mrb[0].mxu0 %v314
  %v862 = vpop.f32.mrb[0].mxu0
  %v863 = vadd.f32 %v148, %v862
  %v864 = vpop.f32.mrb[0].mxu0
  %865 = vmatprep.mubr.f32.mxu0 0.0
  %866 = vmatmul.mubr.f32.gmra.mrb[0].mxu0 %v317
  %v867 = vpop.f32.mrb[0].mxu0
  %v868 = vadd.f32 %v148, %v867
  %v869 = vpop.f32.mrb[0].mxu0
  %870 = vmatprep.mubr.f32.mxu0 0.0
  %871 = vmatmul.mubr.f32.gmra.mrb[0].mxu0 %v320
  %v872 = vpop.f32.mrb[0].mxu0
  %v873 = vadd.f32 %v148, %v872
  %v874 = vpop.f32.mrb[0].mxu0
  %875 = vmatprep.mubr.f32.mxu0 0.0
  %876 = vmatmul.mubr.f32.gmra.mrb[0].mxu0 %v323
  %v877 = vpop.f32.mrb[0].mxu0
  %v878 = vadd.f32 %v148, %v877
  %v879 = vpop.f32.mrb[0].mxu0
  %880 = vmatprep.mubr.f32.mxu0 0.0
  %881 = vmatmul.mubr.f32.gmra.mrb[0].mxu0 %v326
  %v882 = vpop.f32.mrb[0].mxu0
  %v883 = vadd.f32 %v148, %v882
  %v884 = vpop.f32.mrb[0].mxu0
  %885 = vmatprep.mubr.f32.mxu0 0.0
  %886 = vmatmul.mubr.f32.gmra.mrb[0].mxu0 %v329
  %v887 = vpop.f32.mrb[0].mxu0
  %v888 = vadd.f32 %v148, %v887
  %v889 = vpop.f32.mrb[0].mxu0
  %890 = vmatprep.mubr.f32.mxu0 0.0
  %891 = vmatmul.mubr.f32.gmra.mrb[0].mxu0 %v332
  %v892 = vpop.f32.mrb[0].mxu0
  %v893 = vadd.f32 %v148, %v892
  %v894 = vpop.f32.mrb[0].mxu0
  %895 = vmatprep.mubr.f32.mxu0 0.0
  %896 = vmatmul.mubr.f32.gmra.mrb[0].mxu0 %v335
  %v897 = vpop.f32.mrb[0].mxu0
  %v898 = vadd.f32 %v148, %v897
  %v899 = vpop.f32.mrb[0].mxu0
  %900 = vmatprep.mubr.f32.mxu0 0.0
  %901 = vmatmul.mubr.f32.gmra.mrb[0].mxu0 %v338
  %v902 = vpop.f32.mrb[0].mxu0
  %v903 = vadd.f32 %v148, %v902
  %v904 = vpop.f32.mrb[0].mxu0
  %905 = vmatprep.mubr.f32.mxu0 0.0
  %906 = vmatmul.mubr.f32.gmra.mrb[0].mxu0 %v341
  %v907 = vpop.f32.mrb[0].mxu0
  %v908 = vadd.f32 %v148, %v907
  %v909 = vpop.f32.mrb[0].mxu0
  %910 = vmatprep.mubr.f32.mxu0 0.0
  %911 = vmatmul.mubr.f32.gmra.mrb[0].mxu0 %v344
  %v912 = vpop.f32.mrb[0].mxu0
  %v913 = vadd.f32 %v148, %v912
  %v914 = vpop.f32.mrb[0].mxu0
  %915 = vmatprep.mubr.f32.mxu0 0.0
  %916 = vmatmul.mubr.f32.gmra.mrb[0].mxu0 %v347
  %v917 = vpop.f32.mrb[0].mxu0
  %v918 = vadd.f32 %v148, %v917
  %v919 = vpop.f32.mrb[0].mxu0
  %920 = vmatprep.mubr.f32.mxu0 0.0
  %921 = vmatmul.mubr.f32.gmra.mrb[0].mxu0 %v350
  %v922 = vpop.f32.mrb[0].mxu0
  %v923 = vadd.f32 %v148, %v922
  %v924 = vpop.f32.mrb[0].mxu0
  %925 = vmatprep.mubr.f32.mxu0 0.0
  %926 = vmatmul.mubr.f32.gmra.mrb[0].mxu0 %v353
  %v927 = vpop.f32.mrb[0].mxu0
  %v928 = vadd.f32 %v148, %v927
  %v929 = vpop.f32.mrb[0].mxu0
  %930 = vmatprep.mubr.f32.mxu0 0.0
  %931 = vmatmul.mubr.f32.gmra.mrb[0].mxu0 %v356
  %v932 = vpop.f32.mrb[0].mxu0
  %v933 = vadd.f32 %v148, %v932
  %v934 = vpop.f32.mrb[0].mxu0
  %935 = vmatprep.mubr.f32.mxu0 0.0
  %936 = vmatmul.mubr.f32.gmra.mrb[0].mxu0 %v359
  %v937 = vpop.f32.mrb[0].mxu0
  %v938 = vadd.f32 %v148, %v937
  %v939 = vpop.f32.mrb[0].mxu0
  %940 = vmatprep.mubr.f32.mxu0 0.0
  %941 = vmatmul.mubr.f32.gmra.mrb[0].mxu0 %v362
  %v942 = vpop.f32.mrb[0].mxu0
  %v943 = vadd.f32 %v148, %v942
  %v944 = vpop.f32.mrb[0].mxu0
  %945 = vmatprep.mubr.f32.mxu0 0.0
  %946 = vmatmul.mubr.f32.gmra.mrb[0].mxu0 %v365
  %v947 = vpop.f32.mrb[0].mxu0
  %v948 = vadd.f32 %v148, %v947
  %v949 = vpop.f32.mrb[0].mxu0
  %950 = vmatprep.mubr.f32.mxu0 0.0
  %951 = vmatmul.mubr.f32.gmra.mrb[0].mxu0 %v368
  %v952 = vpop.f32.mrb[0].mxu0
  %v953 = vadd.f32 %v148, %v952
  %v954 = vpop.f32.mrb[0].mxu0
  %955 = vmatprep.mubr.f32.mxu0 0.0
  %956 = vmatmul.mubr.f32.gmra.mrb[0].mxu0 %v371
  %v957 = vpop.f32.mrb[0].mxu0
  %v958 = vadd.f32 %v148, %v957
  %v959 = vpop.f32.mrb[0].mxu0
  %960 = vmatprep.mubr.f32.mxu0 0.0
  %961 = vmatmul.mubr.f32.gmra.mrb[0].mxu0 %v374
  %v962 = vpop.f32.mrb[0].mxu0
  %v963 = vadd.f32 %v148, %v962
  %v964 = vpop.f32.mrb[0].mxu0
  %965 = vmatprep.mubr.f32.mxu0 0.0
  %966 = vmatmul.mubr.f32.gmra.mrb[0].mxu0 %v377
  %v967 = vpop.f32.mrb[0].mxu0
  %v968 = vadd.f32 %v148, %v967
  %v969 = vpop.f32.mrb[0].mxu0
  %970 = vmatprep.mubr.f32.mxu0 0.0
  %971 = vmatmul.mubr.f32.gmra.mrb[0].mxu0 %v380
  %v972 = vpop.f32.mrb[0].mxu0
  %v973 = vadd.f32 %v148, %v972
  %v974 = vpop.f32.mrb[0].mxu0
  %975 = vmatprep.mubr.f32.mxu0 0.0
  %976 = vmatmul.mubr.f32.gmra.mrb[0].mxu0 %v383
  %v977 = vpop.f32.mrb[0].mxu0
  %v978 = vadd.f32 %v148, %v977
  %v979 = vpop.f32.mrb[0].mxu0
  %980 = vmatprep.mubr.f32.mxu0 0.0
  %981 = vmatmul.mubr.f32.gmra.mrb[0].mxu0 %v386
  %v982 = vpop.f32.mrb[0].mxu0
  %v983 = vadd.f32 %v148, %v982
  %v984 = vpop.f32.mrb[0].mxu0
  %985 = vmatprep.mubr.f32.mxu0 0.0
  %986 = vmatmul.mubr.f32.gmra.mrb[0].mxu0 %v389
  %v987 = vpop.f32.mrb[0].mxu0
  %v988 = vadd.f32 %v148, %v987
  %v989 = vpop.f32.mrb[0].mxu0
  %990 = vmatprep.mubr.f32.mxu0 0.0
  %991 = vmatmul.mubr.f32.gmra.mrb[0].mxu0 %v392
  %v992 = vpop.f32.mrb[0].mxu0
  %v993 = vadd.f32 %v148, %v992
  %v994 = vpop.f32.mrb[0].mxu0
  %995 = vmatprep.mubr.f32.mxu0 0.0
  %996 = vmatmul.mubr.f32.gmra.mrb[0].mxu0 %v395
  %v997 = vpop.f32.mrb[0].mxu0
  %v998 = vadd.f32 %v148, %v997
  %v999 = vpop.f32.mrb[0].mxu0
  %1000 = vmatprep.mubr.f32.mxu0 0.0
  %1001 = vmatmul.mubr.f32.gmra.mrb[0].mxu0 %v398
  %v1002 = vpop.f32.mrb[0].mxu0
  %v1003 = vadd.f32 %v148, %v1002
  %v1004 = vpop.f32.mrb[0].mxu0
  %1005 = vmatprep.mubr.f32.mxu0 0.0
  %1006 = vmatmul.mubr.f32.gmra.mrb[0].mxu0 %v401
  %v1007 = vpop.f32.mrb[0].mxu0
  %v1008 = vadd.f32 %v148, %v1007
  %v1009 = vpop.f32.mrb[0].mxu0
  %1010 = vmatprep.mubr.f32.mxu0 0.0
  %1011 = vmatmul.mubr.f32.gmra.mrb[0].mxu0 %v404
  %v1012 = vpop.f32.mrb[0].mxu0
  %v1013 = vadd.f32 %v148, %v1012
  %v1014 = vpop.f32.mrb[0].mxu0
  %1015 = vmatprep.mubr.f32.mxu0 0.0
  %1016 = vmatmul.mubr.f32.gmra.mrb[0].mxu0 %v407
  %v1017 = vpop.f32.mrb[0].mxu0
  %v1018 = vadd.f32 %v148, %v1017
  %v1019 = vpop.f32.mrb[0].mxu0
  %1020 = vmatprep.mubr.f32.mxu0 0.0
  %1021 = vmatmul.mubr.f32.gmra.mrb[0].mxu0 %v410
  %v1022 = vpop.f32.mrb[0].mxu0
  %v1023 = vadd.f32 %v148, %v1022
  %v1024 = vpop.f32.mrb[0].mxu0
  %1025 = vmatprep.mubr.f32.mxu0 0.0
  %1026 = vmatmul.mubr.f32.gmra.mrb[0].mxu0 %v413
  %v1027 = vpop.f32.mrb[0].mxu0
  %v1028 = vadd.f32 %v148, %v1027
  %v1029 = vpop.f32.mrb[0].mxu0
  %1030 = vmatprep.mubr.f32.mxu0 0.0
  %1031 = vmatmul.mubr.f32.gmra.mrb[0].mxu0 %v416
  %v1032 = vpop.f32.mrb[0].mxu0
  %v1033 = vadd.f32 %v148, %v1032
  %v1034 = vpop.f32.mrb[0].mxu0
  %1035 = vmatprep.mubr.f32.mxu0 0.0
  %1036 = vmatmul.mubr.f32.gmra.mrb[0].mxu0 %v419
  %v1037 = vpop.f32.mrb[0].mxu0
  %v1038 = vadd.f32 %v148, %v1037
  %v1039 = vpop.f32.mrb[0].mxu0
  %1040 = vmatprep.mubr.f32.mxu0 0.0
  %1041 = vmatmul.mubr.f32.gmra.mrb[0].mxu0 %v422
  %v1042 = vpop.f32.mrb[0].mxu0
  %v1043 = vadd.f32 %v148, %v1042
  %v1044 = vpop.f32.mrb[0].mxu0
  %1045 = vmatprep.mubr.f32.mxu0 0.0
  %1046 = vmatmul.mubr.f32.gmra.mrb[0].mxu0 %v425
  %v1047 = vpop.f32.mrb[0].mxu0
  %v1048 = vadd.f32 %v148, %v1047
  %v1049 = vpop.f32.mrb[0].mxu0
  %1050 = vmatprep.mubr.f32.mxu0 0.0
  %1051 = vmatmul.mubr.f32.gmra.mrb[0].mxu0 %v428
  %v1052 = vpop.f32.mrb[0].mxu0
  %v1053 = vadd.f32 %v148, %v1052
  %v1054 = vpop.f32.mrb[0].mxu0
  %1055 = vmatprep.mubr.f32.mxu0 0.0
  %1056 = vmatmul.mubr.f32.gmra.mrb[0].mxu0 %v431
  %v1057 = vpop.f32.mrb[0].mxu0
  %v1058 = vadd.f32 %v148, %v1057
  %v1059 = vpop.f32.mrb[0].mxu0
  %1060 = vmatprep.mubr.f32.mxu0 0.0
  %1061 = vmatmul.mubr.f32.gmra.mrb[0].mxu0 %v434
  %v1062 = vpop.f32.mrb[0].mxu0
  %v1063 = vadd.f32 %v148, %v1062
  %v1064 = vpop.f32.mrb[0].mxu0
  %1065 = vmatprep.mubr.f32.mxu0 0.0
  %1066 = vmatmul.mubr.f32.gmra.mrb[0].mxu0 %v437
  %v1067 = vpop.f32.mrb[0].mxu0
  %v1068 = vadd.f32 %v148, %v1067
  %v1069 = vpop.f32.mrb[0].mxu0
  %1070 = vmatprep.mubr.f32.mxu0 0.0
  %1071 = vmatmul.mubr.f32.gmra.mrb[0].mxu0 %v440
  %v1072 = vpop.f32.mrb[0].mxu0
  %v1073 = vadd.f32 %v148, %v1072
  %v1074 = vpop.f32.mrb[0].mxu0
  %1075 = vmatprep.mubr.f32.mxu0 0.0
  %1076 = vmatmul.mubr.f32.gmra.mrb[0].mxu0 %v443
  %v1077 = vpop.f32.mrb[0].mxu0
  %v1078 = vadd.f32 %v148, %v1077
  %v1079 = vpop.f32.mrb[0].mxu0
  %1080 = vmatprep.mubr.f32.mxu0 0.0
  %1081 = vmatmul.mubr.f32.gmra.mrb[0].mxu0 %v446
  %v1082 = vpop.f32.mrb[0].mxu0
  %v1083 = vadd.f32 %v148, %v1082
  %v1084 = vpop.f32.mrb[0].mxu0
  %1085 = vmatprep.mubr.f32.mxu0 0.0
  %1086 = vmatmul.mubr.f32.gmra.mrb[0].mxu0 %v449
  %v1087 = vpop.f32.mrb[0].mxu0
  %v1088 = vadd.f32 %v148, %v1087
  %v1089 = vpop.f32.mrb[0].mxu0
  %1090 = vmatprep.mubr.f32.mxu0 0.0
  %1091 = vmatmul.mubr.f32.gmra.mrb[0].mxu0 %v452
  %v1092 = vpop.f32.mrb[0].mxu0
  %v1093 = vadd.f32 %v148, %v1092
  %v1094 = vpop.f32.mrb[0].mxu0
  %1095 = vmatprep.mubr.f32.mxu0 0.0
  %1096 = vmatmul.mubr.f32.gmra.mrb[0].mxu0 %v455
  %v1097 = vpop.f32.mrb[0].mxu0
  %v1098 = vadd.f32 %v148, %v1097
  %v1099 = vpop.f32.mrb[0].mxu0
  %1100 = vmatprep.mubr.f32.mxu0 0.0
  %1101 = vmatmul.mubr.f32.gmra.mrb[0].mxu0 %v458
  %v1102 = vpop.f32.mrb[0].mxu0
  %v1103 = vadd.f32 %v148, %v1102
  %v1104 = vpop.f32.mrb[0].mxu0
  %1105 = vmatprep.mubr.f32.mxu0 0.0
  %1106 = vmatmul.mubr.f32.gmra.mrb[0].mxu0 %v461
  %v1107 = vpop.f32.mrb[0].mxu0
  %v1108 = vadd.f32 %v148, %v1107
  %v1109 = vpop.f32.mrb[0].mxu0
  %1110 = vmatprep.mubr.f32.mxu0 0.0
  %1111 = vmatmul.mubr.f32.gmra.mrb[0].mxu0 %v464
  %v1112 = vpop.f32.mrb[0].mxu0
  %v1113 = vadd.f32 %v148, %v1112
  %v1114 = vpop.f32.mrb[0].mxu0
  %1115 = vmatprep.mubr.f32.mxu0 0.0
  %1116 = vmatmul.mubr.f32.gmra.mrb[0].mxu0 %v467
  %v1117 = vpop.f32.mrb[0].mxu0
  %v1118 = vadd.f32 %v148, %v1117
  %v1119 = vpop.f32.mrb[0].mxu0
  %1120 = vmatprep.mubr.f32.mxu0 0.0
  %1121 = vmatmul.mubr.f32.gmra.mrb[0].mxu0 %v470
  %v1122 = vpop.f32.mrb[0].mxu0
  %v1123 = vadd.f32 %v148, %v1122
  %v1124 = vpop.f32.mrb[0].mxu0
  %1125 = vmatprep.mubr.f32.mxu0 0.0
  %1126 = vmatmul.mubr.f32.gmra.mrb[0].mxu0 %v473
  %v1127 = vpop.f32.mrb[0].mxu0
  %v1128 = vadd.f32 %v148, %v1127
  %v1129 = vpop.f32.mrb[0].mxu0
  %1130 = vmatprep.mubr.f32.mxu0 0.0
  %1131 = vmatmul.mubr.f32.gmra.mrb[0].mxu0 %v476
  %v1132 = vpop.f32.mrb[0].mxu0
  %v1133 = vadd.f32 %v148, %v1132
  %v1134 = vpop.f32.mrb[0].mxu0
  %1135 = vmatprep.mubr.f32.mxu0 0.0
  %1136 = vmatmul.mubr.f32.gmra.mrb[0].mxu0 %v479
  %v1137 = vpop.f32.mrb[0].mxu0
  %v1138 = vadd.f32 %v148, %v1137
  %v1139 = vpop.f32.mrb[0].mxu0
  %1140 = vmatprep.mubr.f32.mxu0 0.0
  %1141 = vmatmul.mubr.f32.gmra.mrb[0].mxu0 %v482
  %v1142 = vpop.f32.mrb[0].mxu0
  %v1143 = vadd.f32 %v148, %v1142
  %v1144 = vpop.f32.mrb[0].mxu0
  %1145 = vmatprep.mubr.f32.mxu0 0.0
  %1146 = vmatmul.mubr.f32.gmra.mrb[0].mxu0 %v485
  %v1147 = vpop.f32.mrb[0].mxu0
  %v1148 = vadd.f32 %v148, %v1147
  %v1149 = vpop.f32.mrb[0].mxu0
  %1150 = vmatprep.mubr.f32.mxu0 0.0
  %1151 = vmatmul.mubr.f32.gmra.mrb[0].mxu0 %v488
  %v1152 = vpop.f32.mrb[0].mxu0
  %v1153 = vadd.f32 %v148, %v1152
  %v1154 = vpop.f32.mrb[0].mxu0
  %1155 = vmatprep.mubr.f32.mxu0 0.0
  %1156 = vmatmul.mubr.f32.gmra.mrb[0].mxu0 %v491
  %v1157 = vpop.f32.mrb[0].mxu0
  %v1158 = vadd.f32 %v148, %v1157
  %v1159 = vpop.f32.mrb[0].mxu0
  %1160 = vmatprep.mubr.f32.mxu0 0.0
  %1161 = vmatmul.mubr.f32.gmra.mrb[0].mxu0 %v494
  %v1162 = vpop.f32.mrb[0].mxu0
  %v1163 = vadd.f32 %v148, %v1162
  %v1164 = vpop.f32.mrb[0].mxu0
  %1165 = vmatprep.mubr.f32.mxu0 0.0
  %1166 = vmatmul.mubr.f32.gmra.mrb[0].mxu0 %v497
  %v1167 = vpop.f32.mrb[0].mxu0
  %v1168 = vadd.f32 %v148, %v1167
  %v1169 = vpop.f32.mrb[0].mxu0
  %1170 = vmatprep.mubr.f32.mxu0 0.0
  %1171 = vmatmul.mubr.f32.gmra.mrb[0].mxu0 %v500
  %v1172 = vpop.f32.mrb[0].mxu0
  %v1173 = vadd.f32 %v148, %v1172
  %v1174 = vpop.f32.mrb[0].mxu0
  %1175 = vmatprep.mubr.f32.mxu0 0.0
  %1176 = vmatmul.mubr.f32.gmra.mrb[0].mxu0 %v503
  %v1177 = vpop.f32.mrb[0].mxu0
  %v1178 = vadd.f32 %v148, %v1177
  %v1179 = vpop.f32.mrb[0].mxu0
  %1180 = vmatprep.mubr.f32.mxu0 0.0
  %1181 = vmatmul.mubr.f32.gmra.mrb[0].mxu0 %v506
  %v1182 = vpop.f32.mrb[0].mxu0
  %v1183 = vadd.f32 %v148, %v1182
  %v1184 = vpop.f32.mrb[0].mxu0
  %1185 = vmatprep.mubr.f32.mxu0 0.0
  %1186 = vmatmul.mubr.f32.gmra.mrb[0].mxu0 %v509
  %v1187 = vpop.f32.mrb[0].mxu0
  %v1188 = vadd.f32 %v148, %v1187
  %v1189 = vpop.f32.mrb[0].mxu0
  %1190 = vmatprep.mubr.f32.mxu0 0.0
  %1191 = vmatmul.mubr.f32.gmra.mrb[0].mxu0 %v512
  %v1192 = vpop.f32.mrb[0].mxu0
  %v1193 = vadd.f32 %v148, %v1192
  %v1194 = vpop.f32.mrb[0].mxu0
  %1195 = vmatprep.mubr.f32.mxu0 0.0
  %1196 = vmatmul.mubr.f32.gmra.mrb[0].mxu0 %v515
  %v1197 = vpop.f32.mrb[0].mxu0
  %v1198 = vadd.f32 %v148, %v1197
  %v1199 = vpop.f32.mrb[0].mxu0
  %1200 = vmatprep.mubr.f32.mxu0 0.0
  %1201 = vmatmul.mubr.f32.gmra.mrb[0].mxu0 %v518
  %v1202 = vpop.f32.mrb[0].mxu0
  %v1203 = vadd.f32 %v148, %v1202
  %v1204 = vpop.f32.mrb[0].mxu0
  %1205 = vmatprep.mubr.f32.mxu0 0.0
  %1206 = vmatmul.mubr.f32.gmra.mrb[0].mxu0 %v521
  %v1207 = vpop.f32.mrb[0].mxu0
  %v1208 = vadd.f32 %v148, %v1207
  %v1209 = vpop.f32.mrb[0].mxu0
  %1210 = vmatprep.mubr.f32.mxu0 0.0
  %1211 = vmatmul.mubr.f32.gmra.mrb[0].mxu0 %v524
  %v1212 = vpop.f32.mrb[0].mxu0
  %v1213 = vadd.f32 %v148, %v1212
  %v1214 = vpop.f32.mrb[0].mxu0
  %1215 = vdwg.mxu0
  %v1216 = vmax.f32 %v593, 0.0
  %v1217 = vmax.f32 %v598, 0.0
  %v1218 = vmax.f32 %v603, 0.0
  %v1219 = vmax.f32 %v608, 0.0
  %v1220 = vmax.f32 %v613, 0.0
  %v1221 = vmax.f32 %v618, 0.0
  %v1222 = vmax.f32 %v623, 0.0
  %v1223 = vmax.f32 %v628, 0.0
  %v1224 = vmax.f32 %v633, 0.0
  %v1225 = vmax.f32 %v638, 0.0
  %v1226 = vmax.f32 %v643, 0.0
  %v1227 = vmax.f32 %v648, 0.0
  %v1228 = vmax.f32 %v653, 0.0
  %v1229 = vmax.f32 %v658, 0.0
  %v1230 = vmax.f32 %v663, 0.0
  %v1231 = vmax.f32 %v668, 0.0
  %v1232 = vmax.f32 %v673, 0.0
  %v1233 = vmax.f32 %v678, 0.0
  %v1234 = vmax.f32 %v683, 0.0
  %v1235 = vmax.f32 %v688, 0.0
  %v1236 = vmax.f32 %v693, 0.0
  %v1237 = vmax.f32 %v698, 0.0
  %v1238 = vmax.f32 %v703, 0.0
  %v1239 = vmax.f32 %v708, 0.0
  %v1240 = vmax.f32 %v713, 0.0
  %v1241 = vmax.f32 %v718, 0.0
  %v1242 = vmax.f32 %v723, 0.0
  %v1243 = vmax.f32 %v728, 0.0
  %v1244 = vmax.f32 %v733, 0.0
  %v1245 = vmax.f32 %v738, 0.0
  %v1246 = vmax.f32 %v743, 0.0
  %v1247 = vmax.f32 %v748, 0.0
  %v1248 = vmax.f32 %v753, 0.0
  %v1249 = vmax.f32 %v758, 0.0
  %v1250 = vmax.f32 %v763, 0.0
  %v1251 = vmax.f32 %v768, 0.0
  %v1252 = vmax.f32 %v773, 0.0
  %v1253 = vmax.f32 %v778, 0.0
  %v1254 = vmax.f32 %v783, 0.0
  %v1255 = vmax.f32 %v788, 0.0
  %v1256 = vmax.f32 %v793, 0.0
  %v1257 = vmax.f32 %v798, 0.0
  %v1258 = vmax.f32 %v803, 0.0
  %v1259 = vmax.f32 %v808, 0.0
  %v1260 = vmax.f32 %v813, 0.0
  %v1261 = vmax.f32 %v818, 0.0
  %v1262 = vmax.f32 %v823, 0.0
  %v1263 = vmax.f32 %v828, 0.0
  %v1264 = vmax.f32 %v833, 0.0
  %v1265 = vmax.f32 %v838, 0.0
  %v1266 = vmax.f32 %v843, 0.0
  %v1267 = vmax.f32 %v848, 0.0
  %v1268 = vmax.f32 %v853, 0.0
  %v1269 = vmax.f32 %v858, 0.0
  %v1270 = vmax.f32 %v863, 0.0
  %v1271 = vmax.f32 %v868, 0.0
  %v1272 = vmax.f32 %v873, 0.0
  %v1273 = vmax.f32 %v878, 0.0
  %v1274 = vmax.f32 %v883, 0.0
  %v1275 = vmax.f32 %v888, 0.0
  %v1276 = vmax.f32 %v893, 0.0
  %v1277 = vmax.f32 %v898, 0.0
  %v1278 = vmax.f32 %v903, 0.0
  %v1279 = vmax.f32 %v908, 0.0
  %v1280 = vmax.f32 %v913, 0.0
  %v1281 = vmax.f32 %v918, 0.0
  %v1282 = vmax.f32 %v923, 0.0
  %v1283 = vmax.f32 %v928, 0.0
  %v1284 = vmax.f32 %v933, 0.0
  %v1285 = vmax.f32 %v938, 0.0
  %v1286 = vmax.f32 %v943, 0.0
  %v1287 = vmax.f32 %v948, 0.0
  %v1288 = vmax.f32 %v953, 0.0
  %v1289 = vmax.f32 %v958, 0.0
  %v1290 = vmax.f32 %v963, 0.0
  %v1291 = vmax.f32 %v968, 0.0
  %v1292 = vmax.f32 %v973, 0.0
  %v1293 = vmax.f32 %v978, 0.0
  %v1294 = vmax.f32 %v983, 0.0
  %v1295 = vmax.f32 %v988, 0.0
  %v1296 = vmax.f32 %v993, 0.0
  %v1297 = vmax.f32 %v998, 0.0
  %v1298 = vmax.f32 %v1003, 0.0
  %v1299 = vmax.f32 %v1008, 0.0
  %v1300 = vmax.f32 %v1013, 0.0
  %v1301 = vmax.f32 %v1018, 0.0
  %v1302 = vmax.f32 %v1023, 0.0
  %v1303 = vmax.f32 %v1028, 0.0
  %v1304 = vmax.f32 %v1033, 0.0
  %v1305 = vmax.f32 %v1038, 0.0
  %v1306 = vmax.f32 %v1043, 0.0
  %v1307 = vmax.f32 %v1048, 0.0
  %v1308 = vmax.f32 %v1053, 0.0
  %v1309 = vmax.f32 %v1058, 0.0
  %v1310 = vmax.f32 %v1063, 0.0
  %v1311 = vmax.f32 %v1068, 0.0
  %v1312 = vmax.f32 %v1073, 0.0
  %v1313 = vmax.f32 %v1078, 0.0
  %v1314 = vmax.f32 %v1083, 0.0
  %v1315 = vmax.f32 %v1088, 0.0
  %v1316 = vmax.f32 %v1093, 0.0
  %v1317 = vmax.f32 %v1098, 0.0
  %v1318 = vmax.f32 %v1103, 0.0
  %v1319 = vmax.f32 %v1108, 0.0
  %v1320 = vmax.f32 %v1113, 0.0
  %v1321 = vmax.f32 %v1118, 0.0
  %v1322 = vmax.f32 %v1123, 0.0
  %v1323 = vmax.f32 %v1128, 0.0
  %v1324 = vmax.f32 %v1133, 0.0
  %v1325 = vmax.f32 %v1138, 0.0
  %v1326 = vmax.f32 %v1143, 0.0
  %v1327 = vmax.f32 %v1148, 0.0
  %v1328 = vmax.f32 %v1153, 0.0
  %v1329 = vmax.f32 %v1158, 0.0
  %v1330 = vmax.f32 %v1163, 0.0
  %v1331 = vmax.f32 %v1168, 0.0
  %v1332 = vmax.f32 %v1173, 0.0
  %v1333 = vmax.f32 %v1178, 0.0
  %v1334 = vmax.f32 %v1183, 0.0
  %v1335 = vmax.f32 %v1188, 0.0
  %v1336 = vmax.f32 %v1193, 0.0
  %v1337 = vmax.f32 %v1198, 0.0
  %v1338 = vmax.f32 %v1203, 0.0
  %v1339 = vmax.f32 %v1208, 0.0
  %v1340 = vmax.f32 %v1213, 0.0
  %vm1341 = vcmask 392192
  %1342 = vst.msk [vmem:[%s3] sm:$0xff] %vm1341, %v1216
  %1343 = vst.msk [vmem:[%s3 + $0x8] sm:$0xff] %vm1341, %v1217
  %1344 = vst.msk [vmem:[%s3 + $0x10] sm:$0xff] %vm1341, %v1218
  %1345 = vst.msk [vmem:[%s3 + $0x18] sm:$0xff] %vm1341, %v1219
  %1346 = vst.msk [vmem:[%s3 + $0x20] sm:$0xff] %vm1341, %v1220
  %1347 = vst.msk [vmem:[%s3 + $0x28] sm:$0xff] %vm1341, %v1221
  %1348 = vst.msk [vmem:[%s3 + $0x30] sm:$0xff] %vm1341, %v1222
  %1349 = vst.msk [vmem:[%s3 + $0x38] sm:$0xff] %vm1341, %v1223
  %1350 = vst.msk [vmem:[%s3 + $0x40] sm:$0xff] %vm1341, %v1224
  %1351 = vst.msk [vmem:[%s3 + $0x48] sm:$0xff] %vm1341, %v1225
  %1352 = vst.msk [vmem:[%s3 + $0x50] sm:$0xff] %vm1341, %v1226
  %1353 = vst.msk [vmem:[%s3 + $0x58] sm:$0xff] %vm1341, %v1227
  %1354 = vst.msk [vmem:[%s3 + $0x60] sm:$0xff] %vm1341, %v1228
  %1355 = vst.msk [vmem:[%s3 + $0x68] sm:$0xff] %vm1341, %v1229
  %1356 = vst.msk [vmem:[%s3 + $0x70] sm:$0xff] %vm1341, %v1230
  %1357 = vst.msk [vmem:[%s3 + $0x78] sm:$0xff] %vm1341, %v1231
  %1358 = vst.msk [vmem:[%s3 + $0x80] sm:$0xff] %vm1341, %v1232
  %1359 = vst.msk [vmem:[%s3 + $0x88] sm:$0xff] %vm1341, %v1233
  %1360 = vst.msk [vmem:[%s3 + $0x90] sm:$0xff] %vm1341, %v1234
  %1361 = vst.msk [vmem:[%s3 + $0x98] sm:$0xff] %vm1341, %v1235
  %1362 = vst.msk [vmem:[%s3 + $0xa0] sm:$0xff] %vm1341, %v1236
  %1363 = vst.msk [vmem:[%s3 + $0xa8] sm:$0xff] %vm1341, %v1237
  %1364 = vst.msk [vmem:[%s3 + $0xb0] sm:$0xff] %vm1341, %v1238
  %1365 = vst.msk [vmem:[%s3 + $0xb8] sm:$0xff] %vm1341, %v1239
  %1366 = vst.msk [vmem:[%s3 + $0xc0] sm:$0xff] %vm1341, %v1240
  %1367 = vst.msk [vmem:[%s3 + $0xc8] sm:$0xff] %vm1341, %v1241
  %1368 = vst.msk [vmem:[%s3 + $0xd0] sm:$0xff] %vm1341, %v1242
  %1369 = vst.msk [vmem:[%s3 + $0xd8] sm:$0xff] %vm1341, %v1243
  %1370 = vst.msk [vmem:[%s3 + $0xe0] sm:$0xff] %vm1341, %v1244
  %1371 = vst.msk [vmem:[%s3 + $0xe8] sm:$0xff] %vm1341, %v1245
  %1372 = vst.msk [vmem:[%s3 + $0xf0] sm:$0xff] %vm1341, %v1246
  %1373 = vst.msk [vmem:[%s3 + $0xf8] sm:$0xff] %vm1341, %v1247
  %1374 = vst.msk [vmem:[%s3 + $0x100] sm:$0xff] %vm1341, %v1248
  %1375 = vst.msk [vmem:[%s3 + $0x108] sm:$0xff] %vm1341, %v1249
  %1376 = vst.msk [vmem:[%s3 + $0x110] sm:$0xff] %vm1341, %v1250
  %1377 = vst.msk [vmem:[%s3 + $0x118] sm:$0xff] %vm1341, %v1251
  %1378 = vst.msk [vmem:[%s3 + $0x120] sm:$0xff] %vm1341, %v1252
  %1379 = vst.msk [vmem:[%s3 + $0x128] sm:$0xff] %vm1341, %v1253
  %1380 = vst.msk [vmem:[%s3 + $0x130] sm:$0xff] %vm1341, %v1254
  %1381 = vst.msk [vmem:[%s3 + $0x138] sm:$0xff] %vm1341, %v1255
  %1382 = vst.msk [vmem:[%s3 + $0x140] sm:$0xff] %vm1341, %v1256
  %1383 = vst.msk [vmem:[%s3 + $0x148] sm:$0xff] %vm1341, %v1257
  %1384 = vst.msk [vmem:[%s3 + $0x150] sm:$0xff] %vm1341, %v1258
  %1385 = vst.msk [vmem:[%s3 + $0x158] sm:$0xff] %vm1341, %v1259
  %1386 = vst.msk [vmem:[%s3 + $0x160] sm:$0xff] %vm1341, %v1260
  %1387 = vst.msk [vmem:[%s3 + $0x168] sm:$0xff] %vm1341, %v1261
  %1388 = vst.msk [vmem:[%s3 + $0x170] sm:$0xff] %vm1341, %v1262
  %1389 = vst.msk [vmem:[%s3 + $0x178] sm:$0xff] %vm1341, %v1263
  %1390 = vst.msk [vmem:[%s3 + $0x180] sm:$0xff] %vm1341, %v1264
  %1391 = vst.msk [vmem:[%s3 + $0x188] sm:$0xff] %vm1341, %v1265
  %1392 = vst.msk [vmem:[%s3 + $0x190] sm:$0xff] %vm1341, %v1266
  %1393 = vst.msk [vmem:[%s3 + $0x198] sm:$0xff] %vm1341, %v1267
  %1394 = vst.msk [vmem:[%s3 + $0x1a0] sm:$0xff] %vm1341, %v1268
  %1395 = vst.msk [vmem:[%s3 + $0x1a8] sm:$0xff] %vm1341, %v1269
  %1396 = vst.msk [vmem:[%s3 + $0x1b0] sm:$0xff] %vm1341, %v1270
  %1397 = vst.msk [vmem:[%s3 + $0x1b8] sm:$0xff] %vm1341, %v1271
  %1398 = vst.msk [vmem:[%s3 + $0x1c0] sm:$0xff] %vm1341, %v1272
  %1399 = vst.msk [vmem:[%s3 + $0x1c8] sm:$0xff] %vm1341, %v1273
  %1400 = vst.msk [vmem:[%s3 + $0x1d0] sm:$0xff] %vm1341, %v1274
  %1401 = vst.msk [vmem:[%s3 + $0x1d8] sm:$0xff] %vm1341, %v1275
  %1402 = vst.msk [vmem:[%s3 + $0x1e0] sm:$0xff] %vm1341, %v1276
  %1403 = vst.msk [vmem:[%s3 + $0x1e8] sm:$0xff] %vm1341, %v1277
  %1404 = vst.msk [vmem:[%s3 + $0x1f0] sm:$0xff] %vm1341, %v1278
  %1405 = vst.msk [vmem:[%s3 + $0x1f8] sm:$0xff] %vm1341, %v1279
  %1406 = vst.msk [vmem:[%s3 + $0x200] sm:$0xff] %vm1341, %v1280
  %1407 = vst.msk [vmem:[%s3 + $0x208] sm:$0xff] %vm1341, %v1281
  %1408 = vst.msk [vmem:[%s3 + $0x210] sm:$0xff] %vm1341, %v1282
  %1409 = vst.msk [vmem:[%s3 + $0x218] sm:$0xff] %vm1341, %v1283
  %1410 = vst.msk [vmem:[%s3 + $0x220] sm:$0xff] %vm1341, %v1284
  %1411 = vst.msk [vmem:[%s3 + $0x228] sm:$0xff] %vm1341, %v1285
  %1412 = vst.msk [vmem:[%s3 + $0x230] sm:$0xff] %vm1341, %v1286
  %1413 = vst.msk [vmem:[%s3 + $0x238] sm:$0xff] %vm1341, %v1287
  %1414 = vst.msk [vmem:[%s3 + $0x240] sm:$0xff] %vm1341, %v1288
  %1415 = vst.msk [vmem:[%s3 + $0x248] sm:$0xff] %vm1341, %v1289
  %1416 = vst.msk [vmem:[%s3 + $0x250] sm:$0xff] %vm1341, %v1290
  %1417 = vst.msk [vmem:[%s3 + $0x258] sm:$0xff] %vm1341, %v1291
  %1418 = vst.msk [vmem:[%s3 + $0x260] sm:$0xff] %vm1341, %v1292
  %1419 = vst.msk [vmem:[%s3 + $0x268] sm:$0xff] %vm1341, %v1293
  %1420 = vst.msk [vmem:[%s3 + $0x270] sm:$0xff] %vm1341, %v1294
  %1421 = vst.msk [vmem:[%s3 + $0x278] sm:$0xff] %vm1341, %v1295
  %1422 = vst.msk [vmem:[%s3 + $0x280] sm:$0xff] %vm1341, %v1296
  %1423 = vst.msk [vmem:[%s3 + $0x288] sm:$0xff] %vm1341, %v1297
  %1424 = vst.msk [vmem:[%s3 + $0x290] sm:$0xff] %vm1341, %v1298
  %1425 = vst.msk [vmem:[%s3 + $0x298] sm:$0xff] %vm1341, %v1299
  %1426 = vst.msk [vmem:[%s3 + $0x2a0] sm:$0xff] %vm1341, %v1300
  %1427 = vst.msk [vmem:[%s3 + $0x2a8] sm:$0xff] %vm1341, %v1301
  %1428 = vst.msk [vmem:[%s3 + $0x2b0] sm:$0xff] %vm1341, %v1302
  %1429 = vst.msk [vmem:[%s3 + $0x2b8] sm:$0xff] %vm1341, %v1303
  %1430 = vst.msk [vmem:[%s3 + $0x2c0] sm:$0xff] %vm1341, %v1304
  %1431 = vst.msk [vmem:[%s3 + $0x2c8] sm:$0xff] %vm1341, %v1305
  %1432 = vst.msk [vmem:[%s3 + $0x2d0] sm:$0xff] %vm1341, %v1306
  %1433 = vst.msk [vmem:[%s3 + $0x2d8] sm:$0xff] %vm1341, %v1307
  %1434 = vst.msk [vmem:[%s3 + $0x2e0] sm:$0xff] %vm1341, %v1308
  %1435 = vst.msk [vmem:[%s3 + $0x2e8] sm:$0xff] %vm1341, %v1309
  %1436 = vst.msk [vmem:[%s3 + $0x2f0] sm:$0xff] %vm1341, %v1310
  %1437 = vst.msk [vmem:[%s3 + $0x2f8] sm:$0xff] %vm1341, %v1311
  %1438 = vst.msk [vmem:[%s3 + $0x300] sm:$0xff] %vm1341, %v1312
  %1439 = vst.msk [vmem:[%s3 + $0x308] sm:$0xff] %vm1341, %v1313
  %1440 = vst.msk [vmem:[%s3 + $0x310] sm:$0xff] %vm1341, %v1314
  %1441 = vst.msk [vmem:[%s3 + $0x318] sm:$0xff] %vm1341, %v1315
  %1442 = vst.msk [vmem:[%s3 + $0x320] sm:$0xff] %vm1341, %v1316
  %1443 = vst.msk [vmem:[%s3 + $0x328] sm:$0xff] %vm1341, %v1317
  %1444 = vst.msk [vmem:[%s3 + $0x330] sm:$0xff] %vm1341, %v1318
  %1445 = vst.msk [vmem:[%s3 + $0x338] sm:$0xff] %vm1341, %v1319
  %1446 = vst.msk [vmem:[%s3 + $0x340] sm:$0xff] %vm1341, %v1320
  %1447 = vst.msk [vmem:[%s3 + $0x348] sm:$0xff] %vm1341, %v1321
  %1448 = vst.msk [vmem:[%s3 + $0x350] sm:$0xff] %vm1341, %v1322
  %1449 = vst.msk [vmem:[%s3 + $0x358] sm:$0xff] %vm1341, %v1323
  %1450 = vst.msk [vmem:[%s3 + $0x360] sm:$0xff] %vm1341, %v1324
  %1451 = vst.msk [vmem:[%s3 + $0x368] sm:$0xff] %vm1341, %v1325
  %1452 = vst.msk [vmem:[%s3 + $0x370] sm:$0xff] %vm1341, %v1326
  %1453 = vst.msk [vmem:[%s3 + $0x378] sm:$0xff] %vm1341, %v1327
  %1454 = vst.msk [vmem:[%s3 + $0x380] sm:$0xff] %vm1341, %v1328
  %1455 = vst.msk [vmem:[%s3 + $0x388] sm:$0xff] %vm1341, %v1329
  %1456 = vst.msk [vmem:[%s3 + $0x390] sm:$0xff] %vm1341, %v1330
  %1457 = vst.msk [vmem:[%s3 + $0x398] sm:$0xff] %vm1341, %v1331
  %1458 = vst.msk [vmem:[%s3 + $0x3a0] sm:$0xff] %vm1341, %v1332
  %1459 = vst.msk [vmem:[%s3 + $0x3a8] sm:$0xff] %vm1341, %v1333
  %1460 = vst.msk [vmem:[%s3 + $0x3b0] sm:$0xff] %vm1341, %v1334
  %1461 = vst.msk [vmem:[%s3 + $0x3b8] sm:$0xff] %vm1341, %v1335
  %1462 = vst.msk [vmem:[%s3 + $0x3c0] sm:$0xff] %vm1341, %v1336
  %1463 = vst.msk [vmem:[%s3 + $0x3c8] sm:$0xff] %vm1341, %v1337
  %1464 = vst.msk [vmem:[%s3 + $0x3d0] sm:$0xff] %vm1341, %v1338
  %1465 = vst.msk [vmem:[%s3 + $0x3d8] sm:$0xff] %vm1341, %v1339
  %1466 = vst.msk [vmem:[%s3 + $0x3e0] sm:$0xff] %vm1341, %v1340
  // Predicated region
  $region14: #{tpu_custom_call.1} parent=0 // pred_check
    _
  $region15: #{tpu_custom_call.1} parent=0 // pred_check_branch
    %1468 = sbr.rel (0) target = $region17
  $region16: #{tpu_custom_call.1} parent=0 // pred_region
    _
  $region17: #{tpu_custom_call.1} parent=0 // pred_fallthru
    _
  // Predicated region
  $region18: #{tpu_custom_call.1} parent=0 // pred_check
    _
  $region19: #{tpu_custom_call.1} parent=0 // pred_check_branch
    %1470 = sbr.rel (0) target = $region21
  $region20: #{tpu_custom_call.1} parent=0 // pred_region
    _
  $region21: #{tpu_custom_call.1} parent=0 // pred_fallthru
    _

</llo_original>
